<compile_context>
chip_gen: v7x
topology: tpu7x:2x2x1
jax: 0.10.0
libtpu: 0.0.40
codegen_flags: <defaults>
</compile_context>

<pallas_src>
import functools
import math

import jax
import jax.numpy as jnp
from jax import lax
from jax.experimental import pallas as pl
from jax.experimental.pallas import tpu as pltpu


def replk_block_kernel(x_ref, w1_ref, b1_ref, wdw_ref, bdw_ref, w2_ref, b2_ref,
                       o_ref, sh_ref, *, H, W, Cdw, ks, nblk, halo):
    """One batch tile (nblk images) per grid step, lane-flattened layout.

    x_ref  : (nblk*H, W*Cin)   rows of the (N*H, W*Cin) input slab
    w1_ref : (W*Cin, W*Cdw)    pw1 (prelkb_bn + 1x1 conv + BN fused), block-diag
    b1_ref : (1, W*Cdw)
    wdw_ref: (ks*ks, W*Cdw)    merged depthwise taps, tiled W times on lanes
    bdw_ref: (1, W*Cdw)
    w2_ref : (W*Cdw, W*Cin)    pw2 (1x1 conv + BN fused), block-diag
    b2_ref : (1, W*Cin)
    o_ref  : (nblk*H, W*Cin)
    sh_ref : VMEM (nblk, halo+H+halo, ks*W*Cdw) scratch: ks horizontally
             pre-shifted copies of the pw1 activations, vertical zero halo.
    """
    p = ks // 2
    LW = W * Cdw
    M = nblk * H

    # --- pw1: prelkb_bn + 1x1 conv + BN fused; one MXU matmul over the whole
    # batch tile, then ReLU.
    t = jnp.dot(x_ref[...].astype(jnp.float32), w1_ref[...],
                preferred_element_type=jnp.float32) + b1_ref[...]
    t = jnp.maximum(t, 0.0)                                    # (M, LW)

    # --- Build the ks horizontally shifted copies of t in-register.  A shift
    # by (j - p) pixels is a lane roll by (j - p)*Cdw within each image row
    # (lane = w*Cdw + c); rolled-in lanes are masked to zero at the W border.
    lane = lax.broadcasted_iota(jnp.int32, (M, LW), 1)
    shifted = []
    for j in range(ks):
        d = (j - p) * Cdw
        if d == 0:
            shifted.append(t)
        else:
            r = pltpu.roll(t, shift=(-d) % LW, axis=1)
            if d > 0:
                shifted.append(jnp.where(lane < LW - d, r, 0.0))
            else:
                shifted.append(jnp.where(lane >= -d, r, 0.0))
    wide = jnp.concatenate(shifted, axis=1)                    # (M, ks*LW)

    # --- Stage into VMEM with an aligned vertical zero halo so every tap read
    # below is fully lane-aligned.  Halo strips are whole (8, ks*LW) tiles ->
    # unmasked stores; re-zeroed every step (cheap, and correct under megacore
    # "parallel" sharding where a core may never execute step 0).
    if halo > 0:
        zeros_halo = jnp.zeros((halo, ks * LW), jnp.float32)
    for b in range(nblk):
        if halo > 0:
            sh_ref[b, 0:halo, :] = zeros_halo
            sh_ref[b, halo + H:halo + H + halo, :] = zeros_halo
        sh_ref[b, halo:halo + H, :] = wide[b * H:(b + 1) * H, :]

    # --- Merged depthwise large+small kernel: ks*ks taps.  Per tap row i, one
    # lane-aligned (H, ks*LW) load; per tap, a static 128-aligned slice + VPU
    # FMA.  Two accumulator chains per loop level keep the 4 VALU slots
    # pipelined; accumulators start from the first product (no jnp.zeros).
    # TODO(synk): for real ks=31, convert the i loop to lax.fori_loop with a
    # small unroll to bound code size / vreg pressure.
    outs = []
    for b in range(nblk):
        acc = [None, None]
        for i in range(ks):
            r0 = halo - p + i
            blk = sh_ref[b, r0:r0 + H, :]                      # (H, ks*LW)
            part = [None, None]
            for j in range(ks):
                w_tap = wdw_ref[i * ks + j:i * ks + j + 1, :]  # (1, LW)
                term = blk[:, j * LW:(j + 1) * LW] * w_tap
                s = j & 1
                part[s] = term if part[s] is None else part[s] + term
            pi = part[0] if part[1] is None else part[0] + part[1]
            s = i & 1
            acc[s] = pi if acc[s] is None else acc[s] + pi
        outs.append(acc[0] if acc[1] is None else acc[0] + acc[1])
    a = jnp.concatenate(outs, axis=0) if nblk > 1 else outs[0]  # (M, LW)
    a = jnp.maximum(a + bdw_ref[...], 0.0)                     # lk_nonlinear ReLU

    # --- pw2: 1x1 conv + BN fused (block-diag matmul) + residual add
    # (drop_path = 0 -> identity).  x re-read here, not kept live above.
    y = jnp.dot(a, w2_ref[...], preferred_element_type=jnp.float32) + b2_ref[...]
    o_ref[...] = (x_ref[...].astype(jnp.float32) + y).astype(o_ref.dtype)


def replk_block(x_nhwc, kp, ks):
    """x_nhwc: (N, H, W, Cin); kp: packed params from pack_kernel_params."""
    N, H, W, Cin = x_nhwc.shape
    WCin = kp['w1'].shape[0]          # W * Cin_pad
    LW = kp['w1'].shape[1]            # W * Cdw_pad
    Cin_p = WCin // W
    Cdw_p = LW // W
    p = ks // 2

    # Lane-dense I/O slab: zero-pad channels so W*Cin_p is a multiple of 128.
    if Cin_p != Cin:
        x_nhwc = jnp.pad(x_nhwc, ((0, 0), (0, 0), (0, 0), (0, Cin_p - Cin)))
    x_flat = x_nhwc.reshape(N * H, WCin)

    # Images per grid step: largest divisor of N that pushes the matmul M
    # dimension toward 128 rows (amortises per-step overhead, fills MXU rows).
    target = max(1, pl.cdiv(128, H))
    nblk = 1
    for d in range(1, N + 1):
        if N % d == 0 and d <= target:
            nblk = d
    MR = nblk * H

    halo = ((p + 7) // 8) * 8         # vertical halo rounded to a full sublane tile
    Hp = halo + H + halo

    grid_spec = pltpu.PrefetchScalarGridSpec(
        num_scalar_prefetch=0,
        grid=(N // nblk,),
        in_specs=[
            pl.BlockSpec((MR, WCin), lambda n: (n, 0)),
            pl.BlockSpec(kp['w1'].shape, lambda n: (0, 0)),
            pl.BlockSpec(kp['b1'].shape, lambda n: (0, 0)),
            pl.BlockSpec(kp['wdw'].shape, lambda n: (0, 0)),
            pl.BlockSpec(kp['bdw'].shape, lambda n: (0, 0)),
            pl.BlockSpec(kp['w2'].shape, lambda n: (0, 0)),
            pl.BlockSpec(kp['b2'].shape, lambda n: (0, 0)),
        ],
        out_specs=pl.BlockSpec((MR, WCin), lambda n: (n, 0)),
        scratch_shapes=[pltpu.VMEM((nblk, Hp, ks * LW), jnp.float32)],
    )
    kernel = functools.partial(replk_block_kernel, H=H, W=W, Cdw=Cdw_p, ks=ks,
                               nblk=nblk, halo=halo)

    out_flat = pl.pallas_call(
        kernel,
        out_shape=jax.ShapeDtypeStruct((N * H, WCin), x_nhwc.dtype),
        grid_spec=grid_spec,
        # Batch tiles are independent -> shard across TCs on v7x megacore;
        # harmless no-op on single-TC v5e/v6e.
        compiler_params=pltpu.CompilerParams(dimension_semantics=("parallel",)),
    )(x_flat, kp['w1'], kp['b1'], kp['wdw'], kp['bdw'], kp['w2'], kp['b2'])
    return out_flat.reshape(N, H, W, Cin_p)[..., :Cin]


def pack_kernel_params(prm, W, ks):
    """Re-lay fused module params for the lane-flattened kernel:
       * fold prelkb_bn (y = x*s0 + t0) into pw1,
       * zero-pad channels so W*Cin_p and W*Cdw_p are multiples of 128,
       * pointwise convs -> block-diagonal kron(I_W, w) matmuls,
       * depthwise taps / per-channel vectors tiled W times along lanes.
       (kron layout only for small channel counts; at real RepLKNet widths use
       plain (Cin,Cdw)/(Cdw,Cin) weights with (rows, C) activations.)"""
    Cin, Cdw = prm['w1'].shape

    def pad_c(c):
        unit = 128 // math.gcd(W, 128)
        return ((c + unit - 1) // unit) * unit

    Cin_p, Cdw_p = pad_c(Cin), pad_c(Cdw)

    w1f = prm['s0'].reshape(Cin, 1) * prm['w1']                 # (Cin, Cdw)
    b1f = prm['b1'] + prm['t0'] @ prm['w1']                     # (1, Cdw)

    w1p = jnp.zeros((Cin_p, Cdw_p), jnp.float32).at[:Cin, :Cdw].set(w1f)
    b1p = jnp.zeros((1, Cdw_p), jnp.float32).at[:, :Cdw].set(b1f)
    wdwp = jnp.zeros((ks, ks, Cdw_p), jnp.float32).at[:, :, :Cdw].set(prm['wdw'])
    bdwp = jnp.zeros((1, Cdw_p), jnp.float32).at[:, :Cdw].set(prm['bdw'])
    w2p = jnp.zeros((Cdw_p, Cin_p), jnp.float32).at[:Cdw, :Cin].set(prm['w2'])
    b2p = jnp.zeros((1, Cin_p), jnp.float32).at[:, :Cin].set(prm['b2'])

    eye = jnp.eye(W, dtype=jnp.float32)
    return dict(
        w1=jnp.kron(eye, w1p),                                  # (W*Cin_p, W*Cdw_p)
        b1=jnp.tile(b1p, (1, W)),                               # (1, W*Cdw_p)
        wdw=jnp.tile(wdwp.reshape(ks * ks, Cdw_p), (1, W)),     # (ks*ks, W*Cdw_p)
        bdw=jnp.tile(bdwp, (1, W)),                             # (1, W*Cdw_p)
        w2=jnp.kron(eye, w2p),                                  # (W*Cdw_p, W*Cin_p)
        b2=jnp.tile(b2p, (1, W)),                               # (1, W*Cin_p)
    )


def make_params(key, Cin, Cdw, ks, sk, eps=1e-5):
    """Deterministic synthetic parameters, fused exactly like fuse_bn()."""
    keys = jax.random.split(key, 9)
    pad = (ks - sk) // 2

    def bn(k, c):
        k1, k2, k3, k4 = jax.random.split(k, 4)
        gamma = 1.0 + 0.1 * jax.random.normal(k1, (c,), jnp.float32)
        beta = 0.1 * jax.random.normal(k2, (c,), jnp.float32)
        mean = 0.1 * jax.random.normal(k3, (c,), jnp.float32)
        var = jnp.abs(jax.random.normal(k4, (c,), jnp.float32)) + 0.5
        return gamma, beta, mean, var

    def fuse(w, bnp):
        gamma, beta, mean, var = bnp
        std = jnp.sqrt(var + eps)
        return w * (gamma / std).reshape(-1, 1, 1, 1), beta - mean * gamma / std

    # prelkb_bn (standalone BN, eval mode)
    g0, b0, m0, v0 = bn(keys[0], Cin)
    std0 = jnp.sqrt(v0 + eps)
    s0 = (g0 / std0).reshape(1, Cin)
    t0 = (b0 - m0 * g0 / std0).reshape(1, Cin)

    # pw1: 1x1 conv Cin->Cdw (bias=False) + BN + ReLU
    w_pw1 = 0.2 * jax.random.normal(keys[1], (Cdw, Cin, 1, 1), jnp.float32)
    k1f, b1f = fuse(w_pw1, bn(keys[2], Cdw))
    w1 = jnp.transpose(k1f[:, :, 0, 0], (1, 0))                 # (Cin, Cdw)
    b1 = b1f.reshape(1, Cdw)

    # ReparamLargeKernelConv: depthwise ks x ks + BN, plus depthwise sk x sk + BN
    w_lk = 0.1 * jax.random.normal(keys[3], (Cdw, 1, ks, ks), jnp.float32)
    kLf, bL = fuse(w_lk, bn(keys[4], Cdw))
    w_sm = 0.1 * jax.random.normal(keys[5], (Cdw, 1, sk, sk), jnp.float32)
    kSf, bS = fuse(w_sm, bn(keys[6], Cdw))

    wlk_hwc = jnp.transpose(kLf[:, 0], (1, 2, 0))               # (ks, ks, Cdw)
    wsm_hwc = jnp.transpose(kSf[:, 0], (1, 2, 0))               # (sk, sk, Cdw)
    wdw = wlk_hwc + jnp.pad(wsm_hwc, ((pad, pad), (pad, pad), (0, 0)))
    bdw = (bL + bS).reshape(1, Cdw)

    # pw2: 1x1 conv Cdw->Cin (bias=False) + BN
    w_pw2 = 0.2 * jax.random.normal(keys[7], (Cin, Cdw, 1, 1), jnp.float32)
    k2f, b2f = fuse(w_pw2, bn(keys[8], Cin))
    w2 = jnp.transpose(k2f[:, :, 0, 0], (1, 0))                 # (Cdw, Cin)
    b2 = b2f.reshape(1, Cin)

    params = dict(s0=s0, t0=t0, w1=w1, b1=b1, wdw=wdw, bdw=bdw, w2=w2, b2=b2)
    ref_parts = dict(wlk=wlk_hwc, blk=bL, wsm=wsm_hwc, bsm=bS)
    return params, ref_parts


def ref_forward(x, prm, parts, ks, sk):
    """Plain-JAX reference of the PyTorch forward (NHWC, BN fused, eval mode)."""
    p, ps = ks // 2, sk // 2
    Cdw = prm['w1'].shape[1]
    y = x * prm['s0'].reshape(1, 1, 1, -1) + prm['t0'].reshape(1, 1, 1, -1)
    t = jnp.einsum('nhwc,cd->nhwd', y, prm['w1']) + prm['b1'].reshape(1, 1, 1, -1)
    t = jnp.maximum(t, 0.0)
    dn = ('NHWC', 'HWIO', 'NHWC')
    lk = lax.conv_general_dilated(
        t, parts['wlk'].reshape(ks, ks, 1, Cdw), (1, 1), [(p, p), (p, p)],
        dimension_numbers=dn, feature_group_count=Cdw
    ) + parts['blk'].reshape(1, 1, 1, -1)
    sm = lax.conv_general_dilated(
        t, parts['wsm'].reshape(sk, sk, 1, Cdw), (1, 1), [(ps, ps), (ps, ps)],
        dimension_numbers=dn, feature_group_count=Cdw
    ) + parts['bsm'].reshape(1, 1, 1, -1)
    a = jnp.maximum(lk + sm, 0.0)
    out = jnp.einsum('nhwd,dc->nhwc', a, prm['w2']) + prm['b2'].reshape(1, 1, 1, -1)
    return x + out


if __name__ == "__main__":
    # RepLKBlock(in_channels=4, dw_channels=8, block_lk_size=7, small_kernel=3,
    #            drop_path=0.0, small_kernel_merged=False)
    N, Cin, Cdw, H, W = 2, 4, 8, 16, 16
    ks, sk = 7, 3

    key = jax.random.PRNGKey(0)
    kx, kparam = jax.random.split(key)
    x_nchw = jax.random.normal(kx, (N, Cin, H, W), jnp.float32)  # PyTorch layout
    x = jnp.transpose(x_nchw, (0, 2, 3, 1))                      # -> NHWC

    params, ref_parts = make_params(kparam, Cin, Cdw, ks, sk)
    kparams = pack_kernel_params(params, W, ks)

    out = replk_block(x, kparams, ks)
    out = jax.block_until_ready(out)

    ref = ref_forward(x, params, ref_parts, ks, sk)
    assert out.shape == (N, H, W, Cin)
    assert jnp.allclose(out, ref, atol=1e-3, rtol=1e-3), "mismatch vs JAX reference"

    # back to NCHW if the caller wants PyTorch layout
    _ = jnp.transpose(out, (0, 3, 1, 2))
    print("KERNEL_OK")
</pallas_src>

<mosaic_0001>
module attributes {stable_mosaic.version = 11 : i64} {
  func.func @replk_block_kernel(%arg0: i32, %arg1: memref<32x128xf32, #tpu.memory_space<vmem>>, %arg2: memref<128x128xf32, #tpu.memory_space<vmem>>, %arg3: memref<1x128xf32, #tpu.memory_space<vmem>>, %arg4: memref<49x128xf32, #tpu.memory_space<vmem>>, %arg5: memref<1x128xf32, #tpu.memory_space<vmem>>, %arg6: memref<128x128xf32, #tpu.memory_space<vmem>>, %arg7: memref<1x128xf32, #tpu.memory_space<vmem>>, %arg8: memref<32x128xf32, #tpu.memory_space<vmem>>, %arg9: memref<2x32x896xf32, #tpu.memory_space<vmem>>) attributes {dimension_semantics = [#tpu.dimension_semantics<parallel>], iteration_bounds = array<i64: 1>, scalar_prefetch = 0 : i64, scratch_operands = 1 : i64, tpu.core_type = #tpu.core_type<tc>, window_params = [{transform_indices = @transform_0, window_bounds = array<i64: 32, 128>}, {pipeline_mode = #tpu.pipeline_mode<synchronous>, transform_indices = @transform_1, window_bounds = array<i64: 128, 128>}, {pipeline_mode = #tpu.pipeline_mode<synchronous>, transform_indices = @transform_2, window_bounds = array<i64: 1, 128>}, {pipeline_mode = #tpu.pipeline_mode<synchronous>, transform_indices = @transform_3, window_bounds = array<i64: 49, 128>}, {pipeline_mode = #tpu.pipeline_mode<synchronous>, transform_indices = @transform_4, window_bounds = array<i64: 1, 128>}, {pipeline_mode = #tpu.pipeline_mode<synchronous>, transform_indices = @transform_5, window_bounds = array<i64: 128, 128>}, {pipeline_mode = #tpu.pipeline_mode<synchronous>, transform_indices = @transform_6, window_bounds = array<i64: 1, 128>}, {transform_indices = @transform_7, window_bounds = array<i64: 32, 128>}]} {
    %c0 = arith.constant 0 : index
    %c0_0 = arith.constant 0 : index
    %0 = vector.load %arg1[%c0, %c0_0] : memref<32x128xf32, #tpu.memory_space<vmem>>, vector<32x128xf32>
    %c0_1 = arith.constant 0 : index
    %c0_2 = arith.constant 0 : index
    %1 = vector.load %arg2[%c0_1, %c0_2] : memref<128x128xf32, #tpu.memory_space<vmem>>, vector<128x128xf32>
    %cst = arith.constant dense<0.000000e+00> : vector<32x128xf32>
    %2 = tpu.matmul %0, %1, %cst {dimension_numbers = #tpu.dot_dimension_numbers<[1], [0], [0], [1], [0, 0, 1, 1], [], []>} : vector<32x128xf32>, vector<128x128xf32>, vector<32x128xf32> -> vector<32x128xf32>
    %c0_3 = arith.constant 0 : index
    %c0_4 = arith.constant 0 : index
    %3 = vector.load %arg3[%c0_3, %c0_4] : memref<1x128xf32, #tpu.memory_space<vmem>>, vector<1x128xf32>
    %4 = vector.broadcast %3 : vector<1x128xf32> to vector<32x128xf32>
    %5 = arith.addf %2, %4 : vector<32x128xf32>
    %cst_5 = arith.constant 0.000000e+00 : f32
    %6 = vector.broadcast %cst_5 : f32 to vector<32x128xf32>
    %7 = arith.maximumf %5, %6 : vector<32x128xf32>
    %8 = tpu.iota {dimensions = array<i32: 1>} : vector<32x128xi32>
    %c24_i32 = arith.constant 24 : i32
    %9 = tpu.dynamic_rotate %7 by %c24_i32 dim 1 : vector<32x128xf32>, i32 -> vector<32x128xf32>
    %c24_i32_6 = arith.constant 24 : i32
    %10 = vector.broadcast %c24_i32_6 : i32 to vector<32x128xi32>
    %11 = arith.cmpi sge, %8, %10 : vector<32x128xi32>
    %cst_7 = arith.constant 0.000000e+00 : f32
    %12 = vector.broadcast %cst_7 : f32 to vector<32x128xf32>
    %13 = arith.select %11, %9, %12 : vector<32x128xi1>, vector<32x128xf32>
    %c16_i32 = arith.constant 16 : i32
    %14 = tpu.dynamic_rotate %7 by %c16_i32 dim 1 : vector<32x128xf32>, i32 -> vector<32x128xf32>
    %c16_i32_8 = arith.constant 16 : i32
    %15 = vector.broadcast %c16_i32_8 : i32 to vector<32x128xi32>
    %16 = arith.cmpi sge, %8, %15 : vector<32x128xi32>
    %cst_9 = arith.constant 0.000000e+00 : f32
    %17 = vector.broadcast %cst_9 : f32 to vector<32x128xf32>
    %18 = arith.select %16, %14, %17 : vector<32x128xi1>, vector<32x128xf32>
    %c8_i32 = arith.constant 8 : i32
    %19 = tpu.dynamic_rotate %7 by %c8_i32 dim 1 : vector<32x128xf32>, i32 -> vector<32x128xf32>
    %c8_i32_10 = arith.constant 8 : i32
    %20 = vector.broadcast %c8_i32_10 : i32 to vector<32x128xi32>
    %21 = arith.cmpi sge, %8, %20 : vector<32x128xi32>
    %cst_11 = arith.constant 0.000000e+00 : f32
    %22 = vector.broadcast %cst_11 : f32 to vector<32x128xf32>
    %23 = arith.select %21, %19, %22 : vector<32x128xi1>, vector<32x128xf32>
    %c120_i32 = arith.constant 120 : i32
    %24 = tpu.dynamic_rotate %7 by %c120_i32 dim 1 : vector<32x128xf32>, i32 -> vector<32x128xf32>
    %c120_i32_12 = arith.constant 120 : i32
    %25 = vector.broadcast %c120_i32_12 : i32 to vector<32x128xi32>
    %26 = arith.cmpi slt, %8, %25 : vector<32x128xi32>
    %cst_13 = arith.constant 0.000000e+00 : f32
    %27 = vector.broadcast %cst_13 : f32 to vector<32x128xf32>
    %28 = arith.select %26, %24, %27 : vector<32x128xi1>, vector<32x128xf32>
    %c112_i32 = arith.constant 112 : i32
    %29 = tpu.dynamic_rotate %7 by %c112_i32 dim 1 : vector<32x128xf32>, i32 -> vector<32x128xf32>
    %c112_i32_14 = arith.constant 112 : i32
    %30 = vector.broadcast %c112_i32_14 : i32 to vector<32x128xi32>
    %31 = arith.cmpi slt, %8, %30 : vector<32x128xi32>
    %cst_15 = arith.constant 0.000000e+00 : f32
    %32 = vector.broadcast %cst_15 : f32 to vector<32x128xf32>
    %33 = arith.select %31, %29, %32 : vector<32x128xi1>, vector<32x128xf32>
    %c104_i32 = arith.constant 104 : i32
    %34 = tpu.dynamic_rotate %7 by %c104_i32 dim 1 : vector<32x128xf32>, i32 -> vector<32x128xf32>
    %c104_i32_16 = arith.constant 104 : i32
    %35 = vector.broadcast %c104_i32_16 : i32 to vector<32x128xi32>
    %36 = arith.cmpi slt, %8, %35 : vector<32x128xi32>
    %cst_17 = arith.constant 0.000000e+00 : f32
    %37 = vector.broadcast %cst_17 : f32 to vector<32x128xf32>
    %38 = arith.select %36, %34, %37 : vector<32x128xi1>, vector<32x128xf32>
    %39 = tpu.concatenate %13, %18, %23, %7, %28, %33, %38 in 1 : vector<32x128xf32>, vector<32x128xf32>, vector<32x128xf32>, vector<32x128xf32>, vector<32x128xf32>, vector<32x128xf32>, vector<32x128xf32> -> vector<32x896xf32>
    %cst_18 = arith.constant 0.000000e+00 : f32
    %40 = vector.broadcast %cst_18 : f32 to vector<8x896xf32>
    %c0_19 = arith.constant 0 : index
    %c0_20 = arith.constant 0 : index
    %c0_21 = arith.constant 0 : index
    %41 = vector.load %arg9[%c0_19, %c0_20, %c0_21] : memref<2x32x896xf32, #tpu.memory_space<vmem>>, vector<1x8x896xf32>
    %42 = vector.shape_cast %41 : vector<1x8x896xf32> to vector<8x896xf32>
    %43 = vector.shape_cast %40 : vector<8x896xf32> to vector<1x8x896xf32>
    tpu.vector_store %arg9[%c0_19, %c0_20, %c0_21], %43 {strides = array<i32>} : memref<2x32x896xf32, #tpu.memory_space<vmem>>, vector<1x8x896xf32>,
    %c0_22 = arith.constant 0 : index
    %c24 = arith.constant 24 : index
    %c0_23 = arith.constant 0 : index
    %44 = vector.load %arg9[%c0_22, %c24, %c0_23] : memref<2x32x896xf32, #tpu.memory_space<vmem>>, vector<1x8x896xf32>
    %45 = vector.shape_cast %44 : vector<1x8x896xf32> to vector<8x896xf32>
    %46 = vector.shape_cast %40 : vector<8x896xf32> to vector<1x8x896xf32>
    tpu.vector_store %arg9[%c0_22, %c24, %c0_23], %46 {strides = array<i32>} : memref<2x32x896xf32, #tpu.memory_space<vmem>>, vector<1x8x896xf32>,
    %47 = vector.extract_strided_slice %39 {offsets = [0, 0], sizes = [16, 896], strides = [1, 1]} : vector<32x896xf32> to vector<16x896xf32>
    %c0_24 = arith.constant 0 : index
    %c8 = arith.constant 8 : index
    %c0_25 = arith.constant 0 : index
    %48 = vector.load %arg9[%c0_24, %c8, %c0_25] : memref<2x32x896xf32, #tpu.memory_space<vmem>>, vector<1x16x896xf32>
    %49 = vector.shape_cast %48 : vector<1x16x896xf32> to vector<16x896xf32>
    %50 = vector.shape_cast %47 : vector<16x896xf32> to vector<1x16x896xf32>
    tpu.vector_store %arg9[%c0_24, %c8, %c0_25], %50 {strides = array<i32>} : memref<2x32x896xf32, #tpu.memory_space<vmem>>, vector<1x16x896xf32>,
    %c1 = arith.constant 1 : index
    %c0_26 = arith.constant 0 : index
    %c0_27 = arith.constant 0 : index
    %51 = vector.load %arg9[%c1, %c0_26, %c0_27] : memref<2x32x896xf32, #tpu.memory_space<vmem>>, vector<1x8x896xf32>
    %52 = vector.shape_cast %51 : vector<1x8x896xf32> to vector<8x896xf32>
    %53 = vector.shape_cast %40 : vector<8x896xf32> to vector<1x8x896xf32>
    tpu.vector_store %arg9[%c1, %c0_26, %c0_27], %53 {strides = array<i32>} : memref<2x32x896xf32, #tpu.memory_space<vmem>>, vector<1x8x896xf32>,
    %c1_28 = arith.constant 1 : index
    %c24_29 = arith.constant 24 : index
    %c0_30 = arith.constant 0 : index
    %54 = vector.load %arg9[%c1_28, %c24_29, %c0_30] : memref<2x32x896xf32, #tpu.memory_space<vmem>>, vector<1x8x896xf32>
    %55 = vector.shape_cast %54 : vector<1x8x896xf32> to vector<8x896xf32>
    %56 = vector.shape_cast %40 : vector<8x896xf32> to vector<1x8x896xf32>
    tpu.vector_store %arg9[%c1_28, %c24_29, %c0_30], %56 {strides = array<i32>} : memref<2x32x896xf32, #tpu.memory_space<vmem>>, vector<1x8x896xf32>,
    %57 = vector.extract_strided_slice %39 {offsets = [16, 0], sizes = [16, 896], strides = [1, 1]} : vector<32x896xf32> to vector<16x896xf32>
    %c1_31 = arith.constant 1 : index
    %c8_32 = arith.constant 8 : index
    %c0_33 = arith.constant 0 : index
    %58 = vector.load %arg9[%c1_31, %c8_32, %c0_33] : memref<2x32x896xf32, #tpu.memory_space<vmem>>, vector<1x16x896xf32>
    %59 = vector.shape_cast %58 : vector<1x16x896xf32> to vector<16x896xf32>
    %60 = vector.shape_cast %57 : vector<16x896xf32> to vector<1x16x896xf32>
    tpu.vector_store %arg9[%c1_31, %c8_32, %c0_33], %60 {strides = array<i32>} : memref<2x32x896xf32, #tpu.memory_space<vmem>>, vector<1x16x896xf32>,
    %c0_34 = arith.constant 0 : index
    %c5 = arith.constant 5 : index
    %c0_35 = arith.constant 0 : index
    %61 = vector.load %arg9[%c0_34, %c5, %c0_35] : memref<2x32x896xf32, #tpu.memory_space<vmem>>, vector<1x16x896xf32>
    %62 = vector.shape_cast %61 : vector<1x16x896xf32> to vector<16x896xf32>
    %c0_36 = arith.constant 0 : index
    %c0_37 = arith.constant 0 : index
    %63 = vector.load %arg4[%c0_36, %c0_37] : memref<49x128xf32, #tpu.memory_space<vmem>>, vector<1x128xf32>
    %64 = vector.extract_strided_slice %62 {offsets = [0, 0], sizes = [16, 128], strides = [1, 1]} : vector<16x896xf32> to vector<16x128xf32>
    %65 = vector.broadcast %63 : vector<1x128xf32> to vector<16x128xf32>
    %66 = arith.mulf %64, %65 : vector<16x128xf32>
    %c1_38 = arith.constant 1 : index
    %c0_39 = arith.constant 0 : index
    %67 = vector.load %arg4[%c1_38, %c0_39] : memref<49x128xf32, #tpu.memory_space<vmem>>, vector<1x128xf32>
    %68 = vector.extract_strided_slice %62 {offsets = [0, 128], sizes = [16, 128], strides = [1, 1]} : vector<16x896xf32> to vector<16x128xf32>
    %69 = vector.broadcast %67 : vector<1x128xf32> to vector<16x128xf32>
    %70 = arith.mulf %68, %69 : vector<16x128xf32>
    %c2 = arith.constant 2 : index
    %c0_40 = arith.constant 0 : index
    %71 = vector.load %arg4[%c2, %c0_40] : memref<49x128xf32, #tpu.memory_space<vmem>>, vector<1x128xf32>
    %72 = vector.extract_strided_slice %62 {offsets = [0, 256], sizes = [16, 128], strides = [1, 1]} : vector<16x896xf32> to vector<16x128xf32>
    %73 = vector.broadcast %71 : vector<1x128xf32> to vector<16x128xf32>
    %74 = arith.mulf %72, %73 : vector<16x128xf32>
    %75 = arith.addf %66, %74 : vector<16x128xf32>
    %c3 = arith.constant 3 : index
    %c0_41 = arith.constant 0 : index
    %76 = vector.load %arg4[%c3, %c0_41] : memref<49x128xf32, #tpu.memory_space<vmem>>, vector<1x128xf32>
    %77 = vector.extract_strided_slice %62 {offsets = [0, 384], sizes = [16, 128], strides = [1, 1]} : vector<16x896xf32> to vector<16x128xf32>
    %78 = vector.broadcast %76 : vector<1x128xf32> to vector<16x128xf32>
    %79 = arith.mulf %77, %78 : vector<16x128xf32>
    %80 = arith.addf %70, %79 : vector<16x128xf32>
    %c4 = arith.constant 4 : index
    %c0_42 = arith.constant 0 : index
    %81 = vector.load %arg4[%c4, %c0_42] : memref<49x128xf32, #tpu.memory_space<vmem>>, vector<1x128xf32>
    %82 = vector.extract_strided_slice %62 {offsets = [0, 512], sizes = [16, 128], strides = [1, 1]} : vector<16x896xf32> to vector<16x128xf32>
    %83 = vector.broadcast %81 : vector<1x128xf32> to vector<16x128xf32>
    %84 = arith.mulf %82, %83 : vector<16x128xf32>
    %85 = arith.addf %75, %84 : vector<16x128xf32>
    %c5_43 = arith.constant 5 : index
    %c0_44 = arith.constant 0 : index
    %86 = vector.load %arg4[%c5_43, %c0_44] : memref<49x128xf32, #tpu.memory_space<vmem>>, vector<1x128xf32>
    %87 = vector.extract_strided_slice %62 {offsets = [0, 640], sizes = [16, 128], strides = [1, 1]} : vector<16x896xf32> to vector<16x128xf32>
    %88 = vector.broadcast %86 : vector<1x128xf32> to vector<16x128xf32>
    %89 = arith.mulf %87, %88 : vector<16x128xf32>
    %90 = arith.addf %80, %89 : vector<16x128xf32>
    %c6 = arith.constant 6 : index
    %c0_45 = arith.constant 0 : index
    %91 = vector.load %arg4[%c6, %c0_45] : memref<49x128xf32, #tpu.memory_space<vmem>>, vector<1x128xf32>
    %92 = vector.extract_strided_slice %62 {offsets = [0, 768], sizes = [16, 128], strides = [1, 1]} : vector<16x896xf32> to vector<16x128xf32>
    %93 = vector.broadcast %91 : vector<1x128xf32> to vector<16x128xf32>
    %94 = arith.mulf %92, %93 : vector<16x128xf32>
    %95 = arith.addf %85, %94 : vector<16x128xf32>
    %96 = arith.addf %95, %90 : vector<16x128xf32>
    %c0_46 = arith.constant 0 : index
    %c6_47 = arith.constant 6 : index
    %c0_48 = arith.constant 0 : index
    %97 = vector.load %arg9[%c0_46, %c6_47, %c0_48] : memref<2x32x896xf32, #tpu.memory_space<vmem>>, vector<1x16x896xf32>
    %98 = vector.shape_cast %97 : vector<1x16x896xf32> to vector<16x896xf32>
    %c7 = arith.constant 7 : index
    %c0_49 = arith.constant 0 : index
    %99 = vector.load %arg4[%c7, %c0_49] : memref<49x128xf32, #tpu.memory_space<vmem>>, vector<1x128xf32>
    %100 = vector.extract_strided_slice %98 {offsets = [0, 0], sizes = [16, 128], strides = [1, 1]} : vector<16x896xf32> to vector<16x128xf32>
    %101 = vector.broadcast %99 : vector<1x128xf32> to vector<16x128xf32>
    %102 = arith.mulf %100, %101 : vector<16x128xf32>
    %c8_50 = arith.constant 8 : index
    %c0_51 = arith.constant 0 : index
    %103 = vector.load %arg4[%c8_50, %c0_51] : memref<49x128xf32, #tpu.memory_space<vmem>>, vector<1x128xf32>
    %104 = vector.extract_strided_slice %98 {offsets = [0, 128], sizes = [16, 128], strides = [1, 1]} : vector<16x896xf32> to vector<16x128xf32>
    %105 = vector.broadcast %103 : vector<1x128xf32> to vector<16x128xf32>
    %106 = arith.mulf %104, %105 : vector<16x128xf32>
    %c9 = arith.constant 9 : index
    %c0_52 = arith.constant 0 : index
    %107 = vector.load %arg4[%c9, %c0_52] : memref<49x128xf32, #tpu.memory_space<vmem>>, vector<1x128xf32>
    %108 = vector.extract_strided_slice %98 {offsets = [0, 256], sizes = [16, 128], strides = [1, 1]} : vector<16x896xf32> to vector<16x128xf32>
    %109 = vector.broadcast %107 : vector<1x128xf32> to vector<16x128xf32>
    %110 = arith.mulf %108, %109 : vector<16x128xf32>
    %111 = arith.addf %102, %110 : vector<16x128xf32>
    %c10 = arith.constant 10 : index
    %c0_53 = arith.constant 0 : index
    %112 = vector.load %arg4[%c10, %c0_53] : memref<49x128xf32, #tpu.memory_space<vmem>>, vector<1x128xf32>
    %113 = vector.extract_strided_slice %98 {offsets = [0, 384], sizes = [16, 128], strides = [1, 1]} : vector<16x896xf32> to vector<16x128xf32>
    %114 = vector.broadcast %112 : vector<1x128xf32> to vector<16x128xf32>
    %115 = arith.mulf %113, %114 : vector<16x128xf32>
    %116 = arith.addf %106, %115 : vector<16x128xf32>
    %c11 = arith.constant 11 : index
    %c0_54 = arith.constant 0 : index
    %117 = vector.load %arg4[%c11, %c0_54] : memref<49x128xf32, #tpu.memory_space<vmem>>, vector<1x128xf32>
    %118 = vector.extract_strided_slice %98 {offsets = [0, 512], sizes = [16, 128], strides = [1, 1]} : vector<16x896xf32> to vector<16x128xf32>
    %119 = vector.broadcast %117 : vector<1x128xf32> to vector<16x128xf32>
    %120 = arith.mulf %118, %119 : vector<16x128xf32>
    %121 = arith.addf %111, %120 : vector<16x128xf32>
    %c12 = arith.constant 12 : index
    %c0_55 = arith.constant 0 : index
    %122 = vector.load %arg4[%c12, %c0_55] : memref<49x128xf32, #tpu.memory_space<vmem>>, vector<1x128xf32>
    %123 = vector.extract_strided_slice %98 {offsets = [0, 640], sizes = [16, 128], strides = [1, 1]} : vector<16x896xf32> to vector<16x128xf32>
    %124 = vector.broadcast %122 : vector<1x128xf32> to vector<16x128xf32>
    %125 = arith.mulf %123, %124 : vector<16x128xf32>
    %126 = arith.addf %116, %125 : vector<16x128xf32>
    %c13 = arith.constant 13 : index
    %c0_56 = arith.constant 0 : index
    %127 = vector.load %arg4[%c13, %c0_56] : memref<49x128xf32, #tpu.memory_space<vmem>>, vector<1x128xf32>
    %128 = vector.extract_strided_slice %98 {offsets = [0, 768], sizes = [16, 128], strides = [1, 1]} : vector<16x896xf32> to vector<16x128xf32>
    %129 = vector.broadcast %127 : vector<1x128xf32> to vector<16x128xf32>
    %130 = arith.mulf %128, %129 : vector<16x128xf32>
    %131 = arith.addf %121, %130 : vector<16x128xf32>
    %132 = arith.addf %131, %126 : vector<16x128xf32>
    %c0_57 = arith.constant 0 : index
    %c7_58 = arith.constant 7 : index
    %c0_59 = arith.constant 0 : index
    %133 = vector.load %arg9[%c0_57, %c7_58, %c0_59] : memref<2x32x896xf32, #tpu.memory_space<vmem>>, vector<1x16x896xf32>
    %134 = vector.shape_cast %133 : vector<1x16x896xf32> to vector<16x896xf32>
    %c14 = arith.constant 14 : index
    %c0_60 = arith.constant 0 : index
    %135 = vector.load %arg4[%c14, %c0_60] : memref<49x128xf32, #tpu.memory_space<vmem>>, vector<1x128xf32>
    %136 = vector.extract_strided_slice %134 {offsets = [0, 0], sizes = [16, 128], strides = [1, 1]} : vector<16x896xf32> to vector<16x128xf32>
    %137 = vector.broadcast %135 : vector<1x128xf32> to vector<16x128xf32>
    %138 = arith.mulf %136, %137 : vector<16x128xf32>
    %c15 = arith.constant 15 : index
    %c0_61 = arith.constant 0 : index
    %139 = vector.load %arg4[%c15, %c0_61] : memref<49x128xf32, #tpu.memory_space<vmem>>, vector<1x128xf32>
    %140 = vector.extract_strided_slice %134 {offsets = [0, 128], sizes = [16, 128], strides = [1, 1]} : vector<16x896xf32> to vector<16x128xf32>
    %141 = vector.broadcast %139 : vector<1x128xf32> to vector<16x128xf32>
    %142 = arith.mulf %140, %141 : vector<16x128xf32>
    %c16 = arith.constant 16 : index
    %c0_62 = arith.constant 0 : index
    %143 = vector.load %arg4[%c16, %c0_62] : memref<49x128xf32, #tpu.memory_space<vmem>>, vector<1x128xf32>
    %144 = vector.extract_strided_slice %134 {offsets = [0, 256], sizes = [16, 128], strides = [1, 1]} : vector<16x896xf32> to vector<16x128xf32>
    %145 = vector.broadcast %143 : vector<1x128xf32> to vector<16x128xf32>
    %146 = arith.mulf %144, %145 : vector<16x128xf32>
    %147 = arith.addf %138, %146 : vector<16x128xf32>
    %c17 = arith.constant 17 : index
    %c0_63 = arith.constant 0 : index
    %148 = vector.load %arg4[%c17, %c0_63] : memref<49x128xf32, #tpu.memory_space<vmem>>, vector<1x128xf32>
    %149 = vector.extract_strided_slice %134 {offsets = [0, 384], sizes = [16, 128], strides = [1, 1]} : vector<16x896xf32> to vector<16x128xf32>
    %150 = vector.broadcast %148 : vector<1x128xf32> to vector<16x128xf32>
    %151 = arith.mulf %149, %150 : vector<16x128xf32>
    %152 = arith.addf %142, %151 : vector<16x128xf32>
    %c18 = arith.constant 18 : index
    %c0_64 = arith.constant 0 : index
    %153 = vector.load %arg4[%c18, %c0_64] : memref<49x128xf32, #tpu.memory_space<vmem>>, vector<1x128xf32>
    %154 = vector.extract_strided_slice %134 {offsets = [0, 512], sizes = [16, 128], strides = [1, 1]} : vector<16x896xf32> to vector<16x128xf32>
    %155 = vector.broadcast %153 : vector<1x128xf32> to vector<16x128xf32>
    %156 = arith.mulf %154, %155 : vector<16x128xf32>
    %157 = arith.addf %147, %156 : vector<16x128xf32>
    %c19 = arith.constant 19 : index
    %c0_65 = arith.constant 0 : index
    %158 = vector.load %arg4[%c19, %c0_65] : memref<49x128xf32, #tpu.memory_space<vmem>>, vector<1x128xf32>
    %159 = vector.extract_strided_slice %134 {offsets = [0, 640], sizes = [16, 128], strides = [1, 1]} : vector<16x896xf32> to vector<16x128xf32>
    %160 = vector.broadcast %158 : vector<1x128xf32> to vector<16x128xf32>
    %161 = arith.mulf %159, %160 : vector<16x128xf32>
    %162 = arith.addf %152, %161 : vector<16x128xf32>
    %c20 = arith.constant 20 : index
    %c0_66 = arith.constant 0 : index
    %163 = vector.load %arg4[%c20, %c0_66] : memref<49x128xf32, #tpu.memory_space<vmem>>, vector<1x128xf32>
    %164 = vector.extract_strided_slice %134 {offsets = [0, 768], sizes = [16, 128], strides = [1, 1]} : vector<16x896xf32> to vector<16x128xf32>
    %165 = vector.broadcast %163 : vector<1x128xf32> to vector<16x128xf32>
    %166 = arith.mulf %164, %165 : vector<16x128xf32>
    %167 = arith.addf %157, %166 : vector<16x128xf32>
    %168 = arith.addf %167, %162 : vector<16x128xf32>
    %169 = arith.addf %96, %168 : vector<16x128xf32>
    %c0_67 = arith.constant 0 : index
    %c8_68 = arith.constant 8 : index
    %c0_69 = arith.constant 0 : index
    %170 = vector.load %arg9[%c0_67, %c8_68, %c0_69] : memref<2x32x896xf32, #tpu.memory_space<vmem>>, vector<1x16x896xf32>
    %171 = vector.shape_cast %170 : vector<1x16x896xf32> to vector<16x896xf32>
    %c21 = arith.constant 21 : index
    %c0_70 = arith.constant 0 : index
    %172 = vector.load %arg4[%c21, %c0_70] : memref<49x128xf32, #tpu.memory_space<vmem>>, vector<1x128xf32>
    %173 = vector.extract_strided_slice %171 {offsets = [0, 0], sizes = [16, 128], strides = [1, 1]} : vector<16x896xf32> to vector<16x128xf32>
    %174 = vector.broadcast %172 : vector<1x128xf32> to vector<16x128xf32>
    %175 = arith.mulf %173, %174 : vector<16x128xf32>
    %c22 = arith.constant 22 : index
    %c0_71 = arith.constant 0 : index
    %176 = vector.load %arg4[%c22, %c0_71] : memref<49x128xf32, #tpu.memory_space<vmem>>, vector<1x128xf32>
    %177 = vector.extract_strided_slice %171 {offsets = [0, 128], sizes = [16, 128], strides = [1, 1]} : vector<16x896xf32> to vector<16x128xf32>
    %178 = vector.broadcast %176 : vector<1x128xf32> to vector<16x128xf32>
    %179 = arith.mulf %177, %178 : vector<16x128xf32>
    %c23 = arith.constant 23 : index
    %c0_72 = arith.constant 0 : index
    %180 = vector.load %arg4[%c23, %c0_72] : memref<49x128xf32, #tpu.memory_space<vmem>>, vector<1x128xf32>
    %181 = vector.extract_strided_slice %171 {offsets = [0, 256], sizes = [16, 128], strides = [1, 1]} : vector<16x896xf32> to vector<16x128xf32>
    %182 = vector.broadcast %180 : vector<1x128xf32> to vector<16x128xf32>
    %183 = arith.mulf %181, %182 : vector<16x128xf32>
    %184 = arith.addf %175, %183 : vector<16x128xf32>
    %c24_73 = arith.constant 24 : index
    %c0_74 = arith.constant 0 : index
    %185 = vector.load %arg4[%c24_73, %c0_74] : memref<49x128xf32, #tpu.memory_space<vmem>>, vector<1x128xf32>
    %186 = vector.extract_strided_slice %171 {offsets = [0, 384], sizes = [16, 128], strides = [1, 1]} : vector<16x896xf32> to vector<16x128xf32>
    %187 = vector.broadcast %185 : vector<1x128xf32> to vector<16x128xf32>
    %188 = arith.mulf %186, %187 : vector<16x128xf32>
    %189 = arith.addf %179, %188 : vector<16x128xf32>
    %c25 = arith.constant 25 : index
    %c0_75 = arith.constant 0 : index
    %190 = vector.load %arg4[%c25, %c0_75] : memref<49x128xf32, #tpu.memory_space<vmem>>, vector<1x128xf32>
    %191 = vector.extract_strided_slice %171 {offsets = [0, 512], sizes = [16, 128], strides = [1, 1]} : vector<16x896xf32> to vector<16x128xf32>
    %192 = vector.broadcast %190 : vector<1x128xf32> to vector<16x128xf32>
    %193 = arith.mulf %191, %192 : vector<16x128xf32>
    %194 = arith.addf %184, %193 : vector<16x128xf32>
    %c26 = arith.constant 26 : index
    %c0_76 = arith.constant 0 : index
    %195 = vector.load %arg4[%c26, %c0_76] : memref<49x128xf32, #tpu.memory_space<vmem>>, vector<1x128xf32>
    %196 = vector.extract_strided_slice %171 {offsets = [0, 640], sizes = [16, 128], strides = [1, 1]} : vector<16x896xf32> to vector<16x128xf32>
    %197 = vector.broadcast %195 : vector<1x128xf32> to vector<16x128xf32>
    %198 = arith.mulf %196, %197 : vector<16x128xf32>
    %199 = arith.addf %189, %198 : vector<16x128xf32>
    %c27 = arith.constant 27 : index
    %c0_77 = arith.constant 0 : index
    %200 = vector.load %arg4[%c27, %c0_77] : memref<49x128xf32, #tpu.memory_space<vmem>>, vector<1x128xf32>
    %201 = vector.extract_strided_slice %171 {offsets = [0, 768], sizes = [16, 128], strides = [1, 1]} : vector<16x896xf32> to vector<16x128xf32>
    %202 = vector.broadcast %200 : vector<1x128xf32> to vector<16x128xf32>
    %203 = arith.mulf %201, %202 : vector<16x128xf32>
    %204 = arith.addf %194, %203 : vector<16x128xf32>
    %205 = arith.addf %204, %199 : vector<16x128xf32>
    %206 = arith.addf %132, %205 : vector<16x128xf32>
    %c0_78 = arith.constant 0 : index
    %c9_79 = arith.constant 9 : index
    %c0_80 = arith.constant 0 : index
    %207 = vector.load %arg9[%c0_78, %c9_79, %c0_80] : memref<2x32x896xf32, #tpu.memory_space<vmem>>, vector<1x16x896xf32>
    %208 = vector.shape_cast %207 : vector<1x16x896xf32> to vector<16x896xf32>
    %c28 = arith.constant 28 : index
    %c0_81 = arith.constant 0 : index
    %209 = vector.load %arg4[%c28, %c0_81] : memref<49x128xf32, #tpu.memory_space<vmem>>, vector<1x128xf32>
    %210 = vector.extract_strided_slice %208 {offsets = [0, 0], sizes = [16, 128], strides = [1, 1]} : vector<16x896xf32> to vector<16x128xf32>
    %211 = vector.broadcast %209 : vector<1x128xf32> to vector<16x128xf32>
    %212 = arith.mulf %210, %211 : vector<16x128xf32>
    %c29 = arith.constant 29 : index
    %c0_82 = arith.constant 0 : index
    %213 = vector.load %arg4[%c29, %c0_82] : memref<49x128xf32, #tpu.memory_space<vmem>>, vector<1x128xf32>
    %214 = vector.extract_strided_slice %208 {offsets = [0, 128], sizes = [16, 128], strides = [1, 1]} : vector<16x896xf32> to vector<16x128xf32>
    %215 = vector.broadcast %213 : vector<1x128xf32> to vector<16x128xf32>
    %216 = arith.mulf %214, %215 : vector<16x128xf32>
    %c30 = arith.constant 30 : index
    %c0_83 = arith.constant 0 : index
    %217 = vector.load %arg4[%c30, %c0_83] : memref<49x128xf32, #tpu.memory_space<vmem>>, vector<1x128xf32>
    %218 = vector.extract_strided_slice %208 {offsets = [0, 256], sizes = [16, 128], strides = [1, 1]} : vector<16x896xf32> to vector<16x128xf32>
    %219 = vector.broadcast %217 : vector<1x128xf32> to vector<16x128xf32>
    %220 = arith.mulf %218, %219 : vector<16x128xf32>
    %221 = arith.addf %212, %220 : vector<16x128xf32>
    %c31 = arith.constant 31 : index
    %c0_84 = arith.constant 0 : index
    %222 = vector.load %arg4[%c31, %c0_84] : memref<49x128xf32, #tpu.memory_space<vmem>>, vector<1x128xf32>
    %223 = vector.extract_strided_slice %208 {offsets = [0, 384], sizes = [16, 128], strides = [1, 1]} : vector<16x896xf32> to vector<16x128xf32>
    %224 = vector.broadcast %222 : vector<1x128xf32> to vector<16x128xf32>
    %225 = arith.mulf %223, %224 : vector<16x128xf32>
    %226 = arith.addf %216, %225 : vector<16x128xf32>
    %c32 = arith.constant 32 : index
    %c0_85 = arith.constant 0 : index
    %227 = vector.load %arg4[%c32, %c0_85] : memref<49x128xf32, #tpu.memory_space<vmem>>, vector<1x128xf32>
    %228 = vector.extract_strided_slice %208 {offsets = [0, 512], sizes = [16, 128], strides = [1, 1]} : vector<16x896xf32> to vector<16x128xf32>
    %229 = vector.broadcast %227 : vector<1x128xf32> to vector<16x128xf32>
    %230 = arith.mulf %228, %229 : vector<16x128xf32>
    %231 = arith.addf %221, %230 : vector<16x128xf32>
    %c33 = arith.constant 33 : index
    %c0_86 = arith.constant 0 : index
    %232 = vector.load %arg4[%c33, %c0_86] : memref<49x128xf32, #tpu.memory_space<vmem>>, vector<1x128xf32>
    %233 = vector.extract_strided_slice %208 {offsets = [0, 640], sizes = [16, 128], strides = [1, 1]} : vector<16x896xf32> to vector<16x128xf32>
    %234 = vector.broadcast %232 : vector<1x128xf32> to vector<16x128xf32>
    %235 = arith.mulf %233, %234 : vector<16x128xf32>
    %236 = arith.addf %226, %235 : vector<16x128xf32>
    %c34 = arith.constant 34 : index
    %c0_87 = arith.constant 0 : index
    %237 = vector.load %arg4[%c34, %c0_87] : memref<49x128xf32, #tpu.memory_space<vmem>>, vector<1x128xf32>
    %238 = vector.extract_strided_slice %208 {offsets = [0, 768], sizes = [16, 128], strides = [1, 1]} : vector<16x896xf32> to vector<16x128xf32>
    %239 = vector.broadcast %237 : vector<1x128xf32> to vector<16x128xf32>
    %240 = arith.mulf %238, %239 : vector<16x128xf32>
    %241 = arith.addf %231, %240 : vector<16x128xf32>
    %242 = arith.addf %241, %236 : vector<16x128xf32>
    %243 = arith.addf %169, %242 : vector<16x128xf32>
    %c0_88 = arith.constant 0 : index
    %c10_89 = arith.constant 10 : index
    %c0_90 = arith.constant 0 : index
    %244 = vector.load %arg9[%c0_88, %c10_89, %c0_90] : memref<2x32x896xf32, #tpu.memory_space<vmem>>, vector<1x16x896xf32>
    %245 = vector.shape_cast %244 : vector<1x16x896xf32> to vector<16x896xf32>
    %c35 = arith.constant 35 : index
    %c0_91 = arith.constant 0 : index
    %246 = vector.load %arg4[%c35, %c0_91] : memref<49x128xf32, #tpu.memory_space<vmem>>, vector<1x128xf32>
    %247 = vector.extract_strided_slice %245 {offsets = [0, 0], sizes = [16, 128], strides = [1, 1]} : vector<16x896xf32> to vector<16x128xf32>
    %248 = vector.broadcast %246 : vector<1x128xf32> to vector<16x128xf32>
    %249 = arith.mulf %247, %248 : vector<16x128xf32>
    %c36 = arith.constant 36 : index
    %c0_92 = arith.constant 0 : index
    %250 = vector.load %arg4[%c36, %c0_92] : memref<49x128xf32, #tpu.memory_space<vmem>>, vector<1x128xf32>
    %251 = vector.extract_strided_slice %245 {offsets = [0, 128], sizes = [16, 128], strides = [1, 1]} : vector<16x896xf32> to vector<16x128xf32>
    %252 = vector.broadcast %250 : vector<1x128xf32> to vector<16x128xf32>
    %253 = arith.mulf %251, %252 : vector<16x128xf32>
    %c37 = arith.constant 37 : index
    %c0_93 = arith.constant 0 : index
    %254 = vector.load %arg4[%c37, %c0_93] : memref<49x128xf32, #tpu.memory_space<vmem>>, vector<1x128xf32>
    %255 = vector.extract_strided_slice %245 {offsets = [0, 256], sizes = [16, 128], strides = [1, 1]} : vector<16x896xf32> to vector<16x128xf32>
    %256 = vector.broadcast %254 : vector<1x128xf32> to vector<16x128xf32>
    %257 = arith.mulf %255, %256 : vector<16x128xf32>
    %258 = arith.addf %249, %257 : vector<16x128xf32>
    %c38 = arith.constant 38 : index
    %c0_94 = arith.constant 0 : index
    %259 = vector.load %arg4[%c38, %c0_94] : memref<49x128xf32, #tpu.memory_space<vmem>>, vector<1x128xf32>
    %260 = vector.extract_strided_slice %245 {offsets = [0, 384], sizes = [16, 128], strides = [1, 1]} : vector<16x896xf32> to vector<16x128xf32>
    %261 = vector.broadcast %259 : vector<1x128xf32> to vector<16x128xf32>
    %262 = arith.mulf %260, %261 : vector<16x128xf32>
    %263 = arith.addf %253, %262 : vector<16x128xf32>
    %c39 = arith.constant 39 : index
    %c0_95 = arith.constant 0 : index
    %264 = vector.load %arg4[%c39, %c0_95] : memref<49x128xf32, #tpu.memory_space<vmem>>, vector<1x128xf32>
    %265 = vector.extract_strided_slice %245 {offsets = [0, 512], sizes = [16, 128], strides = [1, 1]} : vector<16x896xf32> to vector<16x128xf32>
    %266 = vector.broadcast %264 : vector<1x128xf32> to vector<16x128xf32>
    %267 = arith.mulf %265, %266 : vector<16x128xf32>
    %268 = arith.addf %258, %267 : vector<16x128xf32>
    %c40 = arith.constant 40 : index
    %c0_96 = arith.constant 0 : index
    %269 = vector.load %arg4[%c40, %c0_96] : memref<49x128xf32, #tpu.memory_space<vmem>>, vector<1x128xf32>
    %270 = vector.extract_strided_slice %245 {offsets = [0, 640], sizes = [16, 128], strides = [1, 1]} : vector<16x896xf32> to vector<16x128xf32>
    %271 = vector.broadcast %269 : vector<1x128xf32> to vector<16x128xf32>
    %272 = arith.mulf %270, %271 : vector<16x128xf32>
    %273 = arith.addf %263, %272 : vector<16x128xf32>
    %c41 = arith.constant 41 : index
    %c0_97 = arith.constant 0 : index
    %274 = vector.load %arg4[%c41, %c0_97] : memref<49x128xf32, #tpu.memory_space<vmem>>, vector<1x128xf32>
    %275 = vector.extract_strided_slice %245 {offsets = [0, 768], sizes = [16, 128], strides = [1, 1]} : vector<16x896xf32> to vector<16x128xf32>
    %276 = vector.broadcast %274 : vector<1x128xf32> to vector<16x128xf32>
    %277 = arith.mulf %275, %276 : vector<16x128xf32>
    %278 = arith.addf %268, %277 : vector<16x128xf32>
    %279 = arith.addf %278, %273 : vector<16x128xf32>
    %280 = arith.addf %206, %279 : vector<16x128xf32>
    %c0_98 = arith.constant 0 : index
    %c11_99 = arith.constant 11 : index
    %c0_100 = arith.constant 0 : index
    %281 = vector.load %arg9[%c0_98, %c11_99, %c0_100] : memref<2x32x896xf32, #tpu.memory_space<vmem>>, vector<1x16x896xf32>
    %282 = vector.shape_cast %281 : vector<1x16x896xf32> to vector<16x896xf32>
    %c42 = arith.constant 42 : index
    %c0_101 = arith.constant 0 : index
    %283 = vector.load %arg4[%c42, %c0_101] : memref<49x128xf32, #tpu.memory_space<vmem>>, vector<1x128xf32>
    %284 = vector.extract_strided_slice %282 {offsets = [0, 0], sizes = [16, 128], strides = [1, 1]} : vector<16x896xf32> to vector<16x128xf32>
    %285 = vector.broadcast %283 : vector<1x128xf32> to vector<16x128xf32>
    %286 = arith.mulf %284, %285 : vector<16x128xf32>
    %c43 = arith.constant 43 : index
    %c0_102 = arith.constant 0 : index
    %287 = vector.load %arg4[%c43, %c0_102] : memref<49x128xf32, #tpu.memory_space<vmem>>, vector<1x128xf32>
    %288 = vector.extract_strided_slice %282 {offsets = [0, 128], sizes = [16, 128], strides = [1, 1]} : vector<16x896xf32> to vector<16x128xf32>
    %289 = vector.broadcast %287 : vector<1x128xf32> to vector<16x128xf32>
    %290 = arith.mulf %288, %289 : vector<16x128xf32>
    %c44 = arith.constant 44 : index
    %c0_103 = arith.constant 0 : index
    %291 = vector.load %arg4[%c44, %c0_103] : memref<49x128xf32, #tpu.memory_space<vmem>>, vector<1x128xf32>
    %292 = vector.extract_strided_slice %282 {offsets = [0, 256], sizes = [16, 128], strides = [1, 1]} : vector<16x896xf32> to vector<16x128xf32>
    %293 = vector.broadcast %291 : vector<1x128xf32> to vector<16x128xf32>
    %294 = arith.mulf %292, %293 : vector<16x128xf32>
    %295 = arith.addf %286, %294 : vector<16x128xf32>
    %c45 = arith.constant 45 : index
    %c0_104 = arith.constant 0 : index
    %296 = vector.load %arg4[%c45, %c0_104] : memref<49x128xf32, #tpu.memory_space<vmem>>, vector<1x128xf32>
    %297 = vector.extract_strided_slice %282 {offsets = [0, 384], sizes = [16, 128], strides = [1, 1]} : vector<16x896xf32> to vector<16x128xf32>
    %298 = vector.broadcast %296 : vector<1x128xf32> to vector<16x128xf32>
    %299 = arith.mulf %297, %298 : vector<16x128xf32>
    %300 = arith.addf %290, %299 : vector<16x128xf32>
    %c46 = arith.constant 46 : index
    %c0_105 = arith.constant 0 : index
    %301 = vector.load %arg4[%c46, %c0_105] : memref<49x128xf32, #tpu.memory_space<vmem>>, vector<1x128xf32>
    %302 = vector.extract_strided_slice %282 {offsets = [0, 512], sizes = [16, 128], strides = [1, 1]} : vector<16x896xf32> to vector<16x128xf32>
    %303 = vector.broadcast %301 : vector<1x128xf32> to vector<16x128xf32>
    %304 = arith.mulf %302, %303 : vector<16x128xf32>
    %305 = arith.addf %295, %304 : vector<16x128xf32>
    %c47 = arith.constant 47 : index
    %c0_106 = arith.constant 0 : index
    %306 = vector.load %arg4[%c47, %c0_106] : memref<49x128xf32, #tpu.memory_space<vmem>>, vector<1x128xf32>
    %307 = vector.extract_strided_slice %282 {offsets = [0, 640], sizes = [16, 128], strides = [1, 1]} : vector<16x896xf32> to vector<16x128xf32>
    %308 = vector.broadcast %306 : vector<1x128xf32> to vector<16x128xf32>
    %309 = arith.mulf %307, %308 : vector<16x128xf32>
    %310 = arith.addf %300, %309 : vector<16x128xf32>
    %c48 = arith.constant 48 : index
    %c0_107 = arith.constant 0 : index
    %311 = vector.load %arg4[%c48, %c0_107] : memref<49x128xf32, #tpu.memory_space<vmem>>, vector<1x128xf32>
    %312 = vector.extract_strided_slice %282 {offsets = [0, 768], sizes = [16, 128], strides = [1, 1]} : vector<16x896xf32> to vector<16x128xf32>
    %313 = vector.broadcast %311 : vector<1x128xf32> to vector<16x128xf32>
    %314 = arith.mulf %312, %313 : vector<16x128xf32>
    %315 = arith.addf %305, %314 : vector<16x128xf32>
    %316 = arith.addf %315, %310 : vector<16x128xf32>
    %317 = arith.addf %243, %316 : vector<16x128xf32>
    %318 = arith.addf %317, %280 : vector<16x128xf32>
    %c1_108 = arith.constant 1 : index
    %c5_109 = arith.constant 5 : index
    %c0_110 = arith.constant 0 : index
    %319 = vector.load %arg9[%c1_108, %c5_109, %c0_110] : memref<2x32x896xf32, #tpu.memory_space<vmem>>, vector<1x16x896xf32>
    %320 = vector.shape_cast %319 : vector<1x16x896xf32> to vector<16x896xf32>
    %c0_111 = arith.constant 0 : index
    %c0_112 = arith.constant 0 : index
    %321 = vector.load %arg4[%c0_111, %c0_112] : memref<49x128xf32, #tpu.memory_space<vmem>>, vector<1x128xf32>
    %322 = vector.extract_strided_slice %320 {offsets = [0, 0], sizes = [16, 128], strides = [1, 1]} : vector<16x896xf32> to vector<16x128xf32>
    %323 = vector.broadcast %321 : vector<1x128xf32> to vector<16x128xf32>
    %324 = arith.mulf %322, %323 : vector<16x128xf32>
    %c1_113 = arith.constant 1 : index
    %c0_114 = arith.constant 0 : index
    %325 = vector.load %arg4[%c1_113, %c0_114] : memref<49x128xf32, #tpu.memory_space<vmem>>, vector<1x128xf32>
    %326 = vector.extract_strided_slice %320 {offsets = [0, 128], sizes = [16, 128], strides = [1, 1]} : vector<16x896xf32> to vector<16x128xf32>
    %327 = vector.broadcast %325 : vector<1x128xf32> to vector<16x128xf32>
    %328 = arith.mulf %326, %327 : vector<16x128xf32>
    %c2_115 = arith.constant 2 : index
    %c0_116 = arith.constant 0 : index
    %329 = vector.load %arg4[%c2_115, %c0_116] : memref<49x128xf32, #tpu.memory_space<vmem>>, vector<1x128xf32>
    %330 = vector.extract_strided_slice %320 {offsets = [0, 256], sizes = [16, 128], strides = [1, 1]} : vector<16x896xf32> to vector<16x128xf32>
    %331 = vector.broadcast %329 : vector<1x128xf32> to vector<16x128xf32>
    %332 = arith.mulf %330, %331 : vector<16x128xf32>
    %333 = arith.addf %324, %332 : vector<16x128xf32>
    %c3_117 = arith.constant 3 : index
    %c0_118 = arith.constant 0 : index
    %334 = vector.load %arg4[%c3_117, %c0_118] : memref<49x128xf32, #tpu.memory_space<vmem>>, vector<1x128xf32>
    %335 = vector.extract_strided_slice %320 {offsets = [0, 384], sizes = [16, 128], strides = [1, 1]} : vector<16x896xf32> to vector<16x128xf32>
    %336 = vector.broadcast %334 : vector<1x128xf32> to vector<16x128xf32>
    %337 = arith.mulf %335, %336 : vector<16x128xf32>
    %338 = arith.addf %328, %337 : vector<16x128xf32>
    %c4_119 = arith.constant 4 : index
    %c0_120 = arith.constant 0 : index
    %339 = vector.load %arg4[%c4_119, %c0_120] : memref<49x128xf32, #tpu.memory_space<vmem>>, vector<1x128xf32>
    %340 = vector.extract_strided_slice %320 {offsets = [0, 512], sizes = [16, 128], strides = [1, 1]} : vector<16x896xf32> to vector<16x128xf32>
    %341 = vector.broadcast %339 : vector<1x128xf32> to vector<16x128xf32>
    %342 = arith.mulf %340, %341 : vector<16x128xf32>
    %343 = arith.addf %333, %342 : vector<16x128xf32>
    %c5_121 = arith.constant 5 : index
    %c0_122 = arith.constant 0 : index
    %344 = vector.load %arg4[%c5_121, %c0_122] : memref<49x128xf32, #tpu.memory_space<vmem>>, vector<1x128xf32>
    %345 = vector.extract_strided_slice %320 {offsets = [0, 640], sizes = [16, 128], strides = [1, 1]} : vector<16x896xf32> to vector<16x128xf32>
    %346 = vector.broadcast %344 : vector<1x128xf32> to vector<16x128xf32>
    %347 = arith.mulf %345, %346 : vector<16x128xf32>
    %348 = arith.addf %338, %347 : vector<16x128xf32>
    %c6_123 = arith.constant 6 : index
    %c0_124 = arith.constant 0 : index
    %349 = vector.load %arg4[%c6_123, %c0_124] : memref<49x128xf32, #tpu.memory_space<vmem>>, vector<1x128xf32>
    %350 = vector.extract_strided_slice %320 {offsets = [0, 768], sizes = [16, 128], strides = [1, 1]} : vector<16x896xf32> to vector<16x128xf32>
    %351 = vector.broadcast %349 : vector<1x128xf32> to vector<16x128xf32>
    %352 = arith.mulf %350, %351 : vector<16x128xf32>
    %353 = arith.addf %343, %352 : vector<16x128xf32>
    %354 = arith.addf %353, %348 : vector<16x128xf32>
    %c1_125 = arith.constant 1 : index
    %c6_126 = arith.constant 6 : index
    %c0_127 = arith.constant 0 : index
    %355 = vector.load %arg9[%c1_125, %c6_126, %c0_127] : memref<2x32x896xf32, #tpu.memory_space<vmem>>, vector<1x16x896xf32>
    %356 = vector.shape_cast %355 : vector<1x16x896xf32> to vector<16x896xf32>
    %c7_128 = arith.constant 7 : index
    %c0_129 = arith.constant 0 : index
    %357 = vector.load %arg4[%c7_128, %c0_129] : memref<49x128xf32, #tpu.memory_space<vmem>>, vector<1x128xf32>
    %358 = vector.extract_strided_slice %356 {offsets = [0, 0], sizes = [16, 128], strides = [1, 1]} : vector<16x896xf32> to vector<16x128xf32>
    %359 = vector.broadcast %357 : vector<1x128xf32> to vector<16x128xf32>
    %360 = arith.mulf %358, %359 : vector<16x128xf32>
    %c8_130 = arith.constant 8 : index
    %c0_131 = arith.constant 0 : index
    %361 = vector.load %arg4[%c8_130, %c0_131] : memref<49x128xf32, #tpu.memory_space<vmem>>, vector<1x128xf32>
    %362 = vector.extract_strided_slice %356 {offsets = [0, 128], sizes = [16, 128], strides = [1, 1]} : vector<16x896xf32> to vector<16x128xf32>
    %363 = vector.broadcast %361 : vector<1x128xf32> to vector<16x128xf32>
    %364 = arith.mulf %362, %363 : vector<16x128xf32>
    %c9_132 = arith.constant 9 : index
    %c0_133 = arith.constant 0 : index
    %365 = vector.load %arg4[%c9_132, %c0_133] : memref<49x128xf32, #tpu.memory_space<vmem>>, vector<1x128xf32>
    %366 = vector.extract_strided_slice %356 {offsets = [0, 256], sizes = [16, 128], strides = [1, 1]} : vector<16x896xf32> to vector<16x128xf32>
    %367 = vector.broadcast %365 : vector<1x128xf32> to vector<16x128xf32>
    %368 = arith.mulf %366, %367 : vector<16x128xf32>
    %369 = arith.addf %360, %368 : vector<16x128xf32>
    %c10_134 = arith.constant 10 : index
    %c0_135 = arith.constant 0 : index
    %370 = vector.load %arg4[%c10_134, %c0_135] : memref<49x128xf32, #tpu.memory_space<vmem>>, vector<1x128xf32>
    %371 = vector.extract_strided_slice %356 {offsets = [0, 384], sizes = [16, 128], strides = [1, 1]} : vector<16x896xf32> to vector<16x128xf32>
    %372 = vector.broadcast %370 : vector<1x128xf32> to vector<16x128xf32>
    %373 = arith.mulf %371, %372 : vector<16x128xf32>
    %374 = arith.addf %364, %373 : vector<16x128xf32>
    %c11_136 = arith.constant 11 : index
    %c0_137 = arith.constant 0 : index
    %375 = vector.load %arg4[%c11_136, %c0_137] : memref<49x128xf32, #tpu.memory_space<vmem>>, vector<1x128xf32>
    %376 = vector.extract_strided_slice %356 {offsets = [0, 512], sizes = [16, 128], strides = [1, 1]} : vector<16x896xf32> to vector<16x128xf32>
    %377 = vector.broadcast %375 : vector<1x128xf32> to vector<16x128xf32>
    %378 = arith.mulf %376, %377 : vector<16x128xf32>
    %379 = arith.addf %369, %378 : vector<16x128xf32>
    %c12_138 = arith.constant 12 : index
    %c0_139 = arith.constant 0 : index
    %380 = vector.load %arg4[%c12_138, %c0_139] : memref<49x128xf32, #tpu.memory_space<vmem>>, vector<1x128xf32>
    %381 = vector.extract_strided_slice %356 {offsets = [0, 640], sizes = [16, 128], strides = [1, 1]} : vector<16x896xf32> to vector<16x128xf32>
    %382 = vector.broadcast %380 : vector<1x128xf32> to vector<16x128xf32>
    %383 = arith.mulf %381, %382 : vector<16x128xf32>
    %384 = arith.addf %374, %383 : vector<16x128xf32>
    %c13_140 = arith.constant 13 : index
    %c0_141 = arith.constant 0 : index
    %385 = vector.load %arg4[%c13_140, %c0_141] : memref<49x128xf32, #tpu.memory_space<vmem>>, vector<1x128xf32>
    %386 = vector.extract_strided_slice %356 {offsets = [0, 768], sizes = [16, 128], strides = [1, 1]} : vector<16x896xf32> to vector<16x128xf32>
    %387 = vector.broadcast %385 : vector<1x128xf32> to vector<16x128xf32>
    %388 = arith.mulf %386, %387 : vector<16x128xf32>
    %389 = arith.addf %379, %388 : vector<16x128xf32>
    %390 = arith.addf %389, %384 : vector<16x128xf32>
    %c1_142 = arith.constant 1 : index
    %c7_143 = arith.constant 7 : index
    %c0_144 = arith.constant 0 : index
    %391 = vector.load %arg9[%c1_142, %c7_143, %c0_144] : memref<2x32x896xf32, #tpu.memory_space<vmem>>, vector<1x16x896xf32>
    %392 = vector.shape_cast %391 : vector<1x16x896xf32> to vector<16x896xf32>
    %c14_145 = arith.constant 14 : index
    %c0_146 = arith.constant 0 : index
    %393 = vector.load %arg4[%c14_145, %c0_146] : memref<49x128xf32, #tpu.memory_space<vmem>>, vector<1x128xf32>
    %394 = vector.extract_strided_slice %392 {offsets = [0, 0], sizes = [16, 128], strides = [1, 1]} : vector<16x896xf32> to vector<16x128xf32>
    %395 = vector.broadcast %393 : vector<1x128xf32> to vector<16x128xf32>
    %396 = arith.mulf %394, %395 : vector<16x128xf32>
    %c15_147 = arith.constant 15 : index
    %c0_148 = arith.constant 0 : index
    %397 = vector.load %arg4[%c15_147, %c0_148] : memref<49x128xf32, #tpu.memory_space<vmem>>, vector<1x128xf32>
    %398 = vector.extract_strided_slice %392 {offsets = [0, 128], sizes = [16, 128], strides = [1, 1]} : vector<16x896xf32> to vector<16x128xf32>
    %399 = vector.broadcast %397 : vector<1x128xf32> to vector<16x128xf32>
    %400 = arith.mulf %398, %399 : vector<16x128xf32>
    %c16_149 = arith.constant 16 : index
    %c0_150 = arith.constant 0 : index
    %401 = vector.load %arg4[%c16_149, %c0_150] : memref<49x128xf32, #tpu.memory_space<vmem>>, vector<1x128xf32>
    %402 = vector.extract_strided_slice %392 {offsets = [0, 256], sizes = [16, 128], strides = [1, 1]} : vector<16x896xf32> to vector<16x128xf32>
    %403 = vector.broadcast %401 : vector<1x128xf32> to vector<16x128xf32>
    %404 = arith.mulf %402, %403 : vector<16x128xf32>
    %405 = arith.addf %396, %404 : vector<16x128xf32>
    %c17_151 = arith.constant 17 : index
    %c0_152 = arith.constant 0 : index
    %406 = vector.load %arg4[%c17_151, %c0_152] : memref<49x128xf32, #tpu.memory_space<vmem>>, vector<1x128xf32>
    %407 = vector.extract_strided_slice %392 {offsets = [0, 384], sizes = [16, 128], strides = [1, 1]} : vector<16x896xf32> to vector<16x128xf32>
    %408 = vector.broadcast %406 : vector<1x128xf32> to vector<16x128xf32>
    %409 = arith.mulf %407, %408 : vector<16x128xf32>
    %410 = arith.addf %400, %409 : vector<16x128xf32>
    %c18_153 = arith.constant 18 : index
    %c0_154 = arith.constant 0 : index
    %411 = vector.load %arg4[%c18_153, %c0_154] : memref<49x128xf32, #tpu.memory_space<vmem>>, vector<1x128xf32>
    %412 = vector.extract_strided_slice %392 {offsets = [0, 512], sizes = [16, 128], strides = [1, 1]} : vector<16x896xf32> to vector<16x128xf32>
    %413 = vector.broadcast %411 : vector<1x128xf32> to vector<16x128xf32>
    %414 = arith.mulf %412, %413 : vector<16x128xf32>
    %415 = arith.addf %405, %414 : vector<16x128xf32>
    %c19_155 = arith.constant 19 : index
    %c0_156 = arith.constant 0 : index
    %416 = vector.load %arg4[%c19_155, %c0_156] : memref<49x128xf32, #tpu.memory_space<vmem>>, vector<1x128xf32>
    %417 = vector.extract_strided_slice %392 {offsets = [0, 640], sizes = [16, 128], strides = [1, 1]} : vector<16x896xf32> to vector<16x128xf32>
    %418 = vector.broadcast %416 : vector<1x128xf32> to vector<16x128xf32>
    %419 = arith.mulf %417, %418 : vector<16x128xf32>
    %420 = arith.addf %410, %419 : vector<16x128xf32>
    %c20_157 = arith.constant 20 : index
    %c0_158 = arith.constant 0 : index
    %421 = vector.load %arg4[%c20_157, %c0_158] : memref<49x128xf32, #tpu.memory_space<vmem>>, vector<1x128xf32>
    %422 = vector.extract_strided_slice %392 {offsets = [0, 768], sizes = [16, 128], strides = [1, 1]} : vector<16x896xf32> to vector<16x128xf32>
    %423 = vector.broadcast %421 : vector<1x128xf32> to vector<16x128xf32>
    %424 = arith.mulf %422, %423 : vector<16x128xf32>
    %425 = arith.addf %415, %424 : vector<16x128xf32>
    %426 = arith.addf %425, %420 : vector<16x128xf32>
    %427 = arith.addf %354, %426 : vector<16x128xf32>
    %c1_159 = arith.constant 1 : index
    %c8_160 = arith.constant 8 : index
    %c0_161 = arith.constant 0 : index
    %428 = vector.load %arg9[%c1_159, %c8_160, %c0_161] : memref<2x32x896xf32, #tpu.memory_space<vmem>>, vector<1x16x896xf32>
    %429 = vector.shape_cast %428 : vector<1x16x896xf32> to vector<16x896xf32>
    %c21_162 = arith.constant 21 : index
    %c0_163 = arith.constant 0 : index
    %430 = vector.load %arg4[%c21_162, %c0_163] : memref<49x128xf32, #tpu.memory_space<vmem>>, vector<1x128xf32>
    %431 = vector.extract_strided_slice %429 {offsets = [0, 0], sizes = [16, 128], strides = [1, 1]} : vector<16x896xf32> to vector<16x128xf32>
    %432 = vector.broadcast %430 : vector<1x128xf32> to vector<16x128xf32>
    %433 = arith.mulf %431, %432 : vector<16x128xf32>
    %c22_164 = arith.constant 22 : index
    %c0_165 = arith.constant 0 : index
    %434 = vector.load %arg4[%c22_164, %c0_165] : memref<49x128xf32, #tpu.memory_space<vmem>>, vector<1x128xf32>
    %435 = vector.extract_strided_slice %429 {offsets = [0, 128], sizes = [16, 128], strides = [1, 1]} : vector<16x896xf32> to vector<16x128xf32>
    %436 = vector.broadcast %434 : vector<1x128xf32> to vector<16x128xf32>
    %437 = arith.mulf %435, %436 : vector<16x128xf32>
    %c23_166 = arith.constant 23 : index
    %c0_167 = arith.constant 0 : index
    %438 = vector.load %arg4[%c23_166, %c0_167] : memref<49x128xf32, #tpu.memory_space<vmem>>, vector<1x128xf32>
    %439 = vector.extract_strided_slice %429 {offsets = [0, 256], sizes = [16, 128], strides = [1, 1]} : vector<16x896xf32> to vector<16x128xf32>
    %440 = vector.broadcast %438 : vector<1x128xf32> to vector<16x128xf32>
    %441 = arith.mulf %439, %440 : vector<16x128xf32>
    %442 = arith.addf %433, %441 : vector<16x128xf32>
    %c24_168 = arith.constant 24 : index
    %c0_169 = arith.constant 0 : index
    %443 = vector.load %arg4[%c24_168, %c0_169] : memref<49x128xf32, #tpu.memory_space<vmem>>, vector<1x128xf32>
    %444 = vector.extract_strided_slice %429 {offsets = [0, 384], sizes = [16, 128], strides = [1, 1]} : vector<16x896xf32> to vector<16x128xf32>
    %445 = vector.broadcast %443 : vector<1x128xf32> to vector<16x128xf32>
    %446 = arith.mulf %444, %445 : vector<16x128xf32>
    %447 = arith.addf %437, %446 : vector<16x128xf32>
    %c25_170 = arith.constant 25 : index
    %c0_171 = arith.constant 0 : index
    %448 = vector.load %arg4[%c25_170, %c0_171] : memref<49x128xf32, #tpu.memory_space<vmem>>, vector<1x128xf32>
    %449 = vector.extract_strided_slice %429 {offsets = [0, 512], sizes = [16, 128], strides = [1, 1]} : vector<16x896xf32> to vector<16x128xf32>
    %450 = vector.broadcast %448 : vector<1x128xf32> to vector<16x128xf32>
    %451 = arith.mulf %449, %450 : vector<16x128xf32>
    %452 = arith.addf %442, %451 : vector<16x128xf32>
    %c26_172 = arith.constant 26 : index
    %c0_173 = arith.constant 0 : index
    %453 = vector.load %arg4[%c26_172, %c0_173] : memref<49x128xf32, #tpu.memory_space<vmem>>, vector<1x128xf32>
    %454 = vector.extract_strided_slice %429 {offsets = [0, 640], sizes = [16, 128], strides = [1, 1]} : vector<16x896xf32> to vector<16x128xf32>
    %455 = vector.broadcast %453 : vector<1x128xf32> to vector<16x128xf32>
    %456 = arith.mulf %454, %455 : vector<16x128xf32>
    %457 = arith.addf %447, %456 : vector<16x128xf32>
    %c27_174 = arith.constant 27 : index
    %c0_175 = arith.constant 0 : index
    %458 = vector.load %arg4[%c27_174, %c0_175] : memref<49x128xf32, #tpu.memory_space<vmem>>, vector<1x128xf32>
    %459 = vector.extract_strided_slice %429 {offsets = [0, 768], sizes = [16, 128], strides = [1, 1]} : vector<16x896xf32> to vector<16x128xf32>
    %460 = vector.broadcast %458 : vector<1x128xf32> to vector<16x128xf32>
    %461 = arith.mulf %459, %460 : vector<16x128xf32>
    %462 = arith.addf %452, %461 : vector<16x128xf32>
    %463 = arith.addf %462, %457 : vector<16x128xf32>
    %464 = arith.addf %390, %463 : vector<16x128xf32>
    %c1_176 = arith.constant 1 : index
    %c9_177 = arith.constant 9 : index
    %c0_178 = arith.constant 0 : index
    %465 = vector.load %arg9[%c1_176, %c9_177, %c0_178] : memref<2x32x896xf32, #tpu.memory_space<vmem>>, vector<1x16x896xf32>
    %466 = vector.shape_cast %465 : vector<1x16x896xf32> to vector<16x896xf32>
    %c28_179 = arith.constant 28 : index
    %c0_180 = arith.constant 0 : index
    %467 = vector.load %arg4[%c28_179, %c0_180] : memref<49x128xf32, #tpu.memory_space<vmem>>, vector<1x128xf32>
    %468 = vector.extract_strided_slice %466 {offsets = [0, 0], sizes = [16, 128], strides = [1, 1]} : vector<16x896xf32> to vector<16x128xf32>
    %469 = vector.broadcast %467 : vector<1x128xf32> to vector<16x128xf32>
    %470 = arith.mulf %468, %469 : vector<16x128xf32>
    %c29_181 = arith.constant 29 : index
    %c0_182 = arith.constant 0 : index
    %471 = vector.load %arg4[%c29_181, %c0_182] : memref<49x128xf32, #tpu.memory_space<vmem>>, vector<1x128xf32>
    %472 = vector.extract_strided_slice %466 {offsets = [0, 128], sizes = [16, 128], strides = [1, 1]} : vector<16x896xf32> to vector<16x128xf32>
    %473 = vector.broadcast %471 : vector<1x128xf32> to vector<16x128xf32>
    %474 = arith.mulf %472, %473 : vector<16x128xf32>
    %c30_183 = arith.constant 30 : index
    %c0_184 = arith.constant 0 : index
    %475 = vector.load %arg4[%c30_183, %c0_184] : memref<49x128xf32, #tpu.memory_space<vmem>>, vector<1x128xf32>
    %476 = vector.extract_strided_slice %466 {offsets = [0, 256], sizes = [16, 128], strides = [1, 1]} : vector<16x896xf32> to vector<16x128xf32>
    %477 = vector.broadcast %475 : vector<1x128xf32> to vector<16x128xf32>
    %478 = arith.mulf %476, %477 : vector<16x128xf32>
    %479 = arith.addf %470, %478 : vector<16x128xf32>
    %c31_185 = arith.constant 31 : index
    %c0_186 = arith.constant 0 : index
    %480 = vector.load %arg4[%c31_185, %c0_186] : memref<49x128xf32, #tpu.memory_space<vmem>>, vector<1x128xf32>
    %481 = vector.extract_strided_slice %466 {offsets = [0, 384], sizes = [16, 128], strides = [1, 1]} : vector<16x896xf32> to vector<16x128xf32>
    %482 = vector.broadcast %480 : vector<1x128xf32> to vector<16x128xf32>
    %483 = arith.mulf %481, %482 : vector<16x128xf32>
    %484 = arith.addf %474, %483 : vector<16x128xf32>
    %c32_187 = arith.constant 32 : index
    %c0_188 = arith.constant 0 : index
    %485 = vector.load %arg4[%c32_187, %c0_188] : memref<49x128xf32, #tpu.memory_space<vmem>>, vector<1x128xf32>
    %486 = vector.extract_strided_slice %466 {offsets = [0, 512], sizes = [16, 128], strides = [1, 1]} : vector<16x896xf32> to vector<16x128xf32>
    %487 = vector.broadcast %485 : vector<1x128xf32> to vector<16x128xf32>
    %488 = arith.mulf %486, %487 : vector<16x128xf32>
    %489 = arith.addf %479, %488 : vector<16x128xf32>
    %c33_189 = arith.constant 33 : index
    %c0_190 = arith.constant 0 : index
    %490 = vector.load %arg4[%c33_189, %c0_190] : memref<49x128xf32, #tpu.memory_space<vmem>>, vector<1x128xf32>
    %491 = vector.extract_strided_slice %466 {offsets = [0, 640], sizes = [16, 128], strides = [1, 1]} : vector<16x896xf32> to vector<16x128xf32>
    %492 = vector.broadcast %490 : vector<1x128xf32> to vector<16x128xf32>
    %493 = arith.mulf %491, %492 : vector<16x128xf32>
    %494 = arith.addf %484, %493 : vector<16x128xf32>
    %c34_191 = arith.constant 34 : index
    %c0_192 = arith.constant 0 : index
    %495 = vector.load %arg4[%c34_191, %c0_192] : memref<49x128xf32, #tpu.memory_space<vmem>>, vector<1x128xf32>
    %496 = vector.extract_strided_slice %466 {offsets = [0, 768], sizes = [16, 128], strides = [1, 1]} : vector<16x896xf32> to vector<16x128xf32>
    %497 = vector.broadcast %495 : vector<1x128xf32> to vector<16x128xf32>
    %498 = arith.mulf %496, %497 : vector<16x128xf32>
    %499 = arith.addf %489, %498 : vector<16x128xf32>
    %500 = arith.addf %499, %494 : vector<16x128xf32>
    %501 = arith.addf %427, %500 : vector<16x128xf32>
    %c1_193 = arith.constant 1 : index
    %c10_194 = arith.constant 10 : index
    %c0_195 = arith.constant 0 : index
    %502 = vector.load %arg9[%c1_193, %c10_194, %c0_195] : memref<2x32x896xf32, #tpu.memory_space<vmem>>, vector<1x16x896xf32>
    %503 = vector.shape_cast %502 : vector<1x16x896xf32> to vector<16x896xf32>
    %c35_196 = arith.constant 35 : index
    %c0_197 = arith.constant 0 : index
    %504 = vector.load %arg4[%c35_196, %c0_197] : memref<49x128xf32, #tpu.memory_space<vmem>>, vector<1x128xf32>
    %505 = vector.extract_strided_slice %503 {offsets = [0, 0], sizes = [16, 128], strides = [1, 1]} : vector<16x896xf32> to vector<16x128xf32>
    %506 = vector.broadcast %504 : vector<1x128xf32> to vector<16x128xf32>
    %507 = arith.mulf %505, %506 : vector<16x128xf32>
    %c36_198 = arith.constant 36 : index
    %c0_199 = arith.constant 0 : index
    %508 = vector.load %arg4[%c36_198, %c0_199] : memref<49x128xf32, #tpu.memory_space<vmem>>, vector<1x128xf32>
    %509 = vector.extract_strided_slice %503 {offsets = [0, 128], sizes = [16, 128], strides = [1, 1]} : vector<16x896xf32> to vector<16x128xf32>
    %510 = vector.broadcast %508 : vector<1x128xf32> to vector<16x128xf32>
    %511 = arith.mulf %509, %510 : vector<16x128xf32>
    %c37_200 = arith.constant 37 : index
    %c0_201 = arith.constant 0 : index
    %512 = vector.load %arg4[%c37_200, %c0_201] : memref<49x128xf32, #tpu.memory_space<vmem>>, vector<1x128xf32>
    %513 = vector.extract_strided_slice %503 {offsets = [0, 256], sizes = [16, 128], strides = [1, 1]} : vector<16x896xf32> to vector<16x128xf32>
    %514 = vector.broadcast %512 : vector<1x128xf32> to vector<16x128xf32>
    %515 = arith.mulf %513, %514 : vector<16x128xf32>
    %516 = arith.addf %507, %515 : vector<16x128xf32>
    %c38_202 = arith.constant 38 : index
    %c0_203 = arith.constant 0 : index
    %517 = vector.load %arg4[%c38_202, %c0_203] : memref<49x128xf32, #tpu.memory_space<vmem>>, vector<1x128xf32>
    %518 = vector.extract_strided_slice %503 {offsets = [0, 384], sizes = [16, 128], strides = [1, 1]} : vector<16x896xf32> to vector<16x128xf32>
    %519 = vector.broadcast %517 : vector<1x128xf32> to vector<16x128xf32>
    %520 = arith.mulf %518, %519 : vector<16x128xf32>
    %521 = arith.addf %511, %520 : vector<16x128xf32>
    %c39_204 = arith.constant 39 : index
    %c0_205 = arith.constant 0 : index
    %522 = vector.load %arg4[%c39_204, %c0_205] : memref<49x128xf32, #tpu.memory_space<vmem>>, vector<1x128xf32>
    %523 = vector.extract_strided_slice %503 {offsets = [0, 512], sizes = [16, 128], strides = [1, 1]} : vector<16x896xf32> to vector<16x128xf32>
    %524 = vector.broadcast %522 : vector<1x128xf32> to vector<16x128xf32>
    %525 = arith.mulf %523, %524 : vector<16x128xf32>
    %526 = arith.addf %516, %525 : vector<16x128xf32>
    %c40_206 = arith.constant 40 : index
    %c0_207 = arith.constant 0 : index
    %527 = vector.load %arg4[%c40_206, %c0_207] : memref<49x128xf32, #tpu.memory_space<vmem>>, vector<1x128xf32>
    %528 = vector.extract_strided_slice %503 {offsets = [0, 640], sizes = [16, 128], strides = [1, 1]} : vector<16x896xf32> to vector<16x128xf32>
    %529 = vector.broadcast %527 : vector<1x128xf32> to vector<16x128xf32>
    %530 = arith.mulf %528, %529 : vector<16x128xf32>
    %531 = arith.addf %521, %530 : vector<16x128xf32>
    %c41_208 = arith.constant 41 : index
    %c0_209 = arith.constant 0 : index
    %532 = vector.load %arg4[%c41_208, %c0_209] : memref<49x128xf32, #tpu.memory_space<vmem>>, vector<1x128xf32>
    %533 = vector.extract_strided_slice %503 {offsets = [0, 768], sizes = [16, 128], strides = [1, 1]} : vector<16x896xf32> to vector<16x128xf32>
    %534 = vector.broadcast %532 : vector<1x128xf32> to vector<16x128xf32>
    %535 = arith.mulf %533, %534 : vector<16x128xf32>
    %536 = arith.addf %526, %535 : vector<16x128xf32>
    %537 = arith.addf %536, %531 : vector<16x128xf32>
    %538 = arith.addf %464, %537 : vector<16x128xf32>
    %c1_210 = arith.constant 1 : index
    %c11_211 = arith.constant 11 : index
    %c0_212 = arith.constant 0 : index
    %539 = vector.load %arg9[%c1_210, %c11_211, %c0_212] : memref<2x32x896xf32, #tpu.memory_space<vmem>>, vector<1x16x896xf32>
    %540 = vector.shape_cast %539 : vector<1x16x896xf32> to vector<16x896xf32>
    %c42_213 = arith.constant 42 : index
    %c0_214 = arith.constant 0 : index
    %541 = vector.load %arg4[%c42_213, %c0_214] : memref<49x128xf32, #tpu.memory_space<vmem>>, vector<1x128xf32>
    %542 = vector.extract_strided_slice %540 {offsets = [0, 0], sizes = [16, 128], strides = [1, 1]} : vector<16x896xf32> to vector<16x128xf32>
    %543 = vector.broadcast %541 : vector<1x128xf32> to vector<16x128xf32>
    %544 = arith.mulf %542, %543 : vector<16x128xf32>
    %c43_215 = arith.constant 43 : index
    %c0_216 = arith.constant 0 : index
    %545 = vector.load %arg4[%c43_215, %c0_216] : memref<49x128xf32, #tpu.memory_space<vmem>>, vector<1x128xf32>
    %546 = vector.extract_strided_slice %540 {offsets = [0, 128], sizes = [16, 128], strides = [1, 1]} : vector<16x896xf32> to vector<16x128xf32>
    %547 = vector.broadcast %545 : vector<1x128xf32> to vector<16x128xf32>
    %548 = arith.mulf %546, %547 : vector<16x128xf32>
    %c44_217 = arith.constant 44 : index
    %c0_218 = arith.constant 0 : index
    %549 = vector.load %arg4[%c44_217, %c0_218] : memref<49x128xf32, #tpu.memory_space<vmem>>, vector<1x128xf32>
    %550 = vector.extract_strided_slice %540 {offsets = [0, 256], sizes = [16, 128], strides = [1, 1]} : vector<16x896xf32> to vector<16x128xf32>
    %551 = vector.broadcast %549 : vector<1x128xf32> to vector<16x128xf32>
    %552 = arith.mulf %550, %551 : vector<16x128xf32>
    %553 = arith.addf %544, %552 : vector<16x128xf32>
    %c45_219 = arith.constant 45 : index
    %c0_220 = arith.constant 0 : index
    %554 = vector.load %arg4[%c45_219, %c0_220] : memref<49x128xf32, #tpu.memory_space<vmem>>, vector<1x128xf32>
    %555 = vector.extract_strided_slice %540 {offsets = [0, 384], sizes = [16, 128], strides = [1, 1]} : vector<16x896xf32> to vector<16x128xf32>
    %556 = vector.broadcast %554 : vector<1x128xf32> to vector<16x128xf32>
    %557 = arith.mulf %555, %556 : vector<16x128xf32>
    %558 = arith.addf %548, %557 : vector<16x128xf32>
    %c46_221 = arith.constant 46 : index
    %c0_222 = arith.constant 0 : index
    %559 = vector.load %arg4[%c46_221, %c0_222] : memref<49x128xf32, #tpu.memory_space<vmem>>, vector<1x128xf32>
    %560 = vector.extract_strided_slice %540 {offsets = [0, 512], sizes = [16, 128], strides = [1, 1]} : vector<16x896xf32> to vector<16x128xf32>
    %561 = vector.broadcast %559 : vector<1x128xf32> to vector<16x128xf32>
    %562 = arith.mulf %560, %561 : vector<16x128xf32>
    %563 = arith.addf %553, %562 : vector<16x128xf32>
    %c47_223 = arith.constant 47 : index
    %c0_224 = arith.constant 0 : index
    %564 = vector.load %arg4[%c47_223, %c0_224] : memref<49x128xf32, #tpu.memory_space<vmem>>, vector<1x128xf32>
    %565 = vector.extract_strided_slice %540 {offsets = [0, 640], sizes = [16, 128], strides = [1, 1]} : vector<16x896xf32> to vector<16x128xf32>
    %566 = vector.broadcast %564 : vector<1x128xf32> to vector<16x128xf32>
    %567 = arith.mulf %565, %566 : vector<16x128xf32>
    %568 = arith.addf %558, %567 : vector<16x128xf32>
    %c48_225 = arith.constant 48 : index
    %c0_226 = arith.constant 0 : index
    %569 = vector.load %arg4[%c48_225, %c0_226] : memref<49x128xf32, #tpu.memory_space<vmem>>, vector<1x128xf32>
    %570 = vector.extract_strided_slice %540 {offsets = [0, 768], sizes = [16, 128], strides = [1, 1]} : vector<16x896xf32> to vector<16x128xf32>
    %571 = vector.broadcast %569 : vector<1x128xf32> to vector<16x128xf32>
    %572 = arith.mulf %570, %571 : vector<16x128xf32>
    %573 = arith.addf %563, %572 : vector<16x128xf32>
    %574 = arith.addf %573, %568 : vector<16x128xf32>
    %575 = arith.addf %501, %574 : vector<16x128xf32>
    %576 = arith.addf %575, %538 : vector<16x128xf32>
    %577 = tpu.concatenate %318, %576 in 0 : vector<16x128xf32>, vector<16x128xf32> -> vector<32x128xf32>
    %c0_227 = arith.constant 0 : index
    %c0_228 = arith.constant 0 : index
    %578 = vector.load %arg5[%c0_227, %c0_228] : memref<1x128xf32, #tpu.memory_space<vmem>>, vector<1x128xf32>
    %579 = vector.broadcast %578 : vector<1x128xf32> to vector<32x128xf32>
    %580 = arith.addf %577, %579 : vector<32x128xf32>
    %cst_229 = arith.constant 0.000000e+00 : f32
    %581 = vector.broadcast %cst_229 : f32 to vector<32x128xf32>
    %582 = arith.maximumf %580, %581 : vector<32x128xf32>
    %c0_230 = arith.constant 0 : index
    %c0_231 = arith.constant 0 : index
    %583 = vector.load %arg6[%c0_230, %c0_231] : memref<128x128xf32, #tpu.memory_space<vmem>>, vector<128x128xf32>
    %cst_232 = arith.constant dense<0.000000e+00> : vector<32x128xf32>
    %584 = tpu.matmul %582, %583, %cst_232 {dimension_numbers = #tpu.dot_dimension_numbers<[1], [0], [0], [1], [0, 0, 1, 1], [], []>} : vector<32x128xf32>, vector<128x128xf32>, vector<32x128xf32> -> vector<32x128xf32>
    %c0_233 = arith.constant 0 : index
    %c0_234 = arith.constant 0 : index
    %585 = vector.load %arg7[%c0_233, %c0_234] : memref<1x128xf32, #tpu.memory_space<vmem>>, vector<1x128xf32>
    %586 = vector.broadcast %585 : vector<1x128xf32> to vector<32x128xf32>
    %587 = arith.addf %584, %586 : vector<32x128xf32>
    %c0_235 = arith.constant 0 : index
    %c0_236 = arith.constant 0 : index
    %588 = vector.load %arg1[%c0_235, %c0_236] : memref<32x128xf32, #tpu.memory_space<vmem>>, vector<32x128xf32>
    %589 = arith.addf %588, %587 : vector<32x128xf32>
    %c0_237 = arith.constant 0 : index
    %c0_238 = arith.constant 0 : index
    %590 = vector.load %arg8[%c0_237, %c0_238] : memref<32x128xf32, #tpu.memory_space<vmem>>, vector<32x128xf32>
    tpu.vector_store %arg8[%c0_237, %c0_238], %589 {strides = array<i32>} : memref<32x128xf32, #tpu.memory_space<vmem>>, vector<32x128xf32>,
    return
  }
  func.func @transform_0(%arg0: i32) -> (i32, i32) {
    %c0_i32 = arith.constant 0 : i32
    %c0_i32_0 = arith.constant 0 : i32
    return %arg0, %c0_i32 : i32, i32
  }
  func.func @transform_1(%arg0: i32) -> (i32, i32) {
    %c0_i32 = arith.constant 0 : i32
    %c0_i32_0 = arith.constant 0 : i32
    %c0_i32_1 = arith.constant 0 : i32
    return %c0_i32, %c0_i32_0 : i32, i32
  }
  func.func @transform_2(%arg0: i32) -> (i32, i32) {
    %c0_i32 = arith.constant 0 : i32
    %c0_i32_0 = arith.constant 0 : i32
    %c0_i32_1 = arith.constant 0 : i32
    return %c0_i32, %c0_i32_0 : i32, i32
  }
  func.func @transform_3(%arg0: i32) -> (i32, i32) {
    %c0_i32 = arith.constant 0 : i32
    %c0_i32_0 = arith.constant 0 : i32
    %c0_i32_1 = arith.constant 0 : i32
    return %c0_i32, %c0_i32_0 : i32, i32
  }
  func.func @transform_4(%arg0: i32) -> (i32, i32) {
    %c0_i32 = arith.constant 0 : i32
    %c0_i32_0 = arith.constant 0 : i32
    %c0_i32_1 = arith.constant 0 : i32
    return %c0_i32, %c0_i32_0 : i32, i32
  }
  func.func @transform_5(%arg0: i32) -> (i32, i32) {
    %c0_i32 = arith.constant 0 : i32
    %c0_i32_0 = arith.constant 0 : i32
    %c0_i32_1 = arith.constant 0 : i32
    return %c0_i32, %c0_i32_0 : i32, i32
  }
  func.func @transform_6(%arg0: i32) -> (i32, i32) {
    %c0_i32 = arith.constant 0 : i32
    %c0_i32_0 = arith.constant 0 : i32
    %c0_i32_1 = arith.constant 0 : i32
    return %c0_i32, %c0_i32_0 : i32, i32
  }
  func.func @transform_7(%arg0: i32) -> (i32, i32) {
    %c0_i32 = arith.constant 0 : i32
    %c0_i32_0 = arith.constant 0 : i32
    return %arg0, %c0_i32 : i32, i32
  }
}

</mosaic_0001>

<llo_original>
// kernel: tpu_custom_call.1
$region0: #{tpu_custom_call.1}
  #allocation0 [shape = 'u32[]', space=smem, size = 0x4, offset = 0x4, fixed_abs, tag = 'smem constant byte address 0x4 - core index']
  #allocation1 [shape = 'u32[144,128]{1,0:T(1,128)}', space=vmem, size = 0x12000, scoped, tag = 'internal scratch']
  #allocation2 [shape = 'f32[2,32,896]{2,1,0:T(8,128)}', space=vmem, size = 0x38000, scoped, tag = 'scratch operand']
  %s0 = inlined_call_operand.hbm [shape: f32[32,128], index: 0, kind: input, shape index: {}]
  %s1 = inlined_call_operand.hbm [shape: f32[128,128], index: 1, kind: input, shape index: {}]
  %s2 = inlined_call_operand.vmem [shape: f32[1,128], index: 2, kind: input, shape index: {}]
  %s3 = inlined_call_operand.hbm [shape: f32[49,128], index: 3, kind: input, shape index: {}]
  %s4 = inlined_call_operand.vmem [shape: f32[1,128], index: 4, kind: input, shape index: {}]
  %s5 = inlined_call_operand.hbm [shape: f32[128,128], index: 5, kind: input, shape index: {}]
  %s6 = inlined_call_operand.vmem [shape: f32[1,128], index: 6, kind: input, shape index: {}]
  %s7 = inlined_call_operand.hbm [shape: f32[32,128], index: 7, kind: output, shape index: {}]
  %s8 = sld [smem:[#allocation0]]
  $region54: #{tpu_custom_call.1} parent=0
    _
  %s10 = ssub.s32 1, %s8
  %s11 = scalar_select 0, %s10, %s8
  $region1: #{tpu_custom_call.1} parent=0
    #allocation3 [shape = 'u8[16384]{0}', space=vmem, size = 0x4000, scoped, tag = 'input window, operand 0, single buffered']
    #allocation4 [shape = 's32[1]{0}', space=sflag, size = 0x4, scoped, tag = 'scoped memory for tpu_custom_call.1']
    #allocation5 [shape = 's32[1]{0}', space=sflag, size = 0x4, scoped, tag = 'scoped memory for tpu_custom_call.1']
    #allocation6 [shape = 'u8[65536]{0}', space=vmem, size = 0x10000, scoped, tag = 'input window, operand 1, single buffered']
    #allocation7 [shape = 's32[1]{0}', space=sflag, size = 0x4, scoped, tag = 'scoped memory for tpu_custom_call.1']
    #allocation8 [shape = 'u8[28672]{0}', space=vmem, size = 0x7000, scoped, tag = 'input window, operand 3, single buffered']
    #allocation9 [shape = 'u8[65536]{0}', space=vmem, size = 0x10000, scoped, tag = 'input window, operand 5, single buffered']
    #allocation10 [shape = 's32[1]{0}', space=sflag, size = 0x4, scoped, tag = 'scoped memory for tpu_custom_call.1']
    #allocation11 [shape = 'u8[16384]{0}', space=vmem, size = 0x4000, scoped, tag = 'output window, operand 0, single buffered']
    %12 = vsyncpa [#allocation4], 0
    %13 = vsyncpa [#allocation7], 0
    %14 = vsyncpa [#allocation10], 0
    %15 = vsyncpa [#allocation5], 0
    // Predicated region
    $region2: #{tpu_custom_call.1} parent=1 // pred_check
      _
    $region3: #{tpu_custom_call.1} parent=1 // pred_check_branch
      %17 = sbr.rel (0) target = $region5
    $region4: #{tpu_custom_call.1} parent=1 // pred_region
      %s19 = ssub.s32 512, 512
      %20 = vsyncadd [#allocation4], %s19
      %s21 = sshll.u32 [#allocation3], 4
      %s22 = int_to_ptr.vmem [resolvable:$true] %s21
      %27 = dma.hbm_to_vmem [thread:$0]  %s0, 512, %s22, [#allocation4], 128, 128, 8
    $region5: #{tpu_custom_call.1} parent=1 // pred_fallthru
      _
    // Predicated region
    $region6: #{tpu_custom_call.1} parent=1 // pred_check
      _
    $region7: #{tpu_custom_call.1} parent=1 // pred_check_branch
      %29 = sbr.rel (0) target = $region9
    $region8: #{tpu_custom_call.1} parent=1 // pred_region
      %s31 = ssub.s32 2048, 2048
      %32 = vsyncadd [#allocation7], %s31
      %s33 = sshll.u32 [#allocation6], 4
      %s34 = int_to_ptr.vmem [resolvable:$true] %s33
      %39 = dma.hbm_to_vmem [thread:$0]  %s1, 2048, %s34, [#allocation7], 128, 128, 8
    $region9: #{tpu_custom_call.1} parent=1 // pred_fallthru
      _
    // Predicated region
    $region10: #{tpu_custom_call.1} parent=1 // pred_check
      _
    $region11: #{tpu_custom_call.1} parent=1 // pred_check_branch
      %41 = sbr.rel (0) target = $region13
    $region12: #{tpu_custom_call.1} parent=1 // pred_region
      _
    $region13: #{tpu_custom_call.1} parent=1 // pred_fallthru
      _
    // Predicated region
    $region14: #{tpu_custom_call.1} parent=1 // pred_check
      _
    $region15: #{tpu_custom_call.1} parent=1 // pred_check_branch
      %43 = sbr.rel (0) target = $region17
    $region16: #{tpu_custom_call.1} parent=1 // pred_region
      %s45 = ssub.s32 896, 896
      %46 = vsyncadd [#allocation7], %s45
      %s47 = sshll.u32 [#allocation8], 4
      %s48 = int_to_ptr.vmem [resolvable:$true] %s47
      %53 = dma.hbm_to_vmem [thread:$0]  %s3, 896, %s48, [#allocation7], 128, 128, 8
    $region17: #{tpu_custom_call.1} parent=1 // pred_fallthru
      _
    // Predicated region
    $region18: #{tpu_custom_call.1} parent=1 // pred_check
      _
    $region19: #{tpu_custom_call.1} parent=1 // pred_check_branch
      %55 = sbr.rel (0) target = $region21
    $region20: #{tpu_custom_call.1} parent=1 // pred_region
      _
    $region21: #{tpu_custom_call.1} parent=1 // pred_fallthru
      _
    // Predicated region
    $region22: #{tpu_custom_call.1} parent=1 // pred_check
      _
    $region23: #{tpu_custom_call.1} parent=1 // pred_check_branch
      %57 = sbr.rel (0) target = $region25
    $region24: #{tpu_custom_call.1} parent=1 // pred_region
      %s59 = ssub.s32 2048, 2048
      %60 = vsyncadd [#allocation10], %s59
      %s61 = sshll.u32 [#allocation9], 4
      %s62 = int_to_ptr.vmem [resolvable:$true] %s61
      %67 = dma.hbm_to_vmem [thread:$0]  %s5, 2048, %s62, [#allocation10], 128, 128, 8
    $region25: #{tpu_custom_call.1} parent=1 // pred_fallthru
      _
    // Predicated region
    $region26: #{tpu_custom_call.1} parent=1 // pred_check
      _
    $region27: #{tpu_custom_call.1} parent=1 // pred_check_branch
      %69 = sbr.rel (0) target = $region29
    $region28: #{tpu_custom_call.1} parent=1 // pred_region
      _
    $region29: #{tpu_custom_call.1} parent=1 // pred_fallthru
      _
    // Predicated region
    $region30: #{tpu_custom_call.1} parent=1 // pred_check
      _
    $region31: #{tpu_custom_call.1} parent=1 // pred_check_branch
      %71 = sbr.rel (0) target = $region33
    $region32: #{tpu_custom_call.1} parent=1 // pred_region
      %72 = dma.done [#allocation4], 512
    $region33: #{tpu_custom_call.1} parent=1 // pred_fallthru
      _
    // Predicated region
    $region34: #{tpu_custom_call.1} parent=1 // pred_check
      _
    $region35: #{tpu_custom_call.1} parent=1 // pred_check_branch
      %74 = sbr.rel (0) target = $region37
    $region36: #{tpu_custom_call.1} parent=1 // pred_region
      %75 = dma.done [#allocation7], 2048
    $region37: #{tpu_custom_call.1} parent=1 // pred_fallthru
      _
    // Predicated region
    $region38: #{tpu_custom_call.1} parent=1 // pred_check
      _
    $region39: #{tpu_custom_call.1} parent=1 // pred_check_branch
      %77 = sbr.rel (0) target = $region41
    $region40: #{tpu_custom_call.1} parent=1 // pred_region
      %78 = dma.done [#allocation7], 896
    $region41: #{tpu_custom_call.1} parent=1 // pred_fallthru
      _
    // Predicated region
    $region42: #{tpu_custom_call.1} parent=1 // pred_check
      _
    $region43: #{tpu_custom_call.1} parent=1 // pred_check_branch
      %80 = sbr.rel (0) target = $region45
    $region44: #{tpu_custom_call.1} parent=1 // pred_region
      %81 = dma.done [#allocation10], 2048
    $region45: #{tpu_custom_call.1} parent=1 // pred_fallthru
      _
    %v82 = vld [vmem:[#allocation3] sm:$0xff]
    %v83 = vld [vmem:[#allocation3 + $0x8] sm:$0xff]
    %v84 = vld [vmem:[#allocation3 + $0x10] sm:$0xff]
    %v85 = vld [vmem:[#allocation3 + $0x18] sm:$0xff]
    %v86 = vld [vmem:[#allocation6] sm:$0xff]
    %v87 = vld [vmem:[#allocation6 + $0x8] sm:$0xff]
    %v88 = vld [vmem:[#allocation6 + $0x10] sm:$0xff]
    %v89 = vld [vmem:[#allocation6 + $0x18] sm:$0xff]
    %v90 = vld [vmem:[#allocation6 + $0x20] sm:$0xff]
    %v91 = vld [vmem:[#allocation6 + $0x28] sm:$0xff]
    %v92 = vld [vmem:[#allocation6 + $0x30] sm:$0xff]
    %v93 = vld [vmem:[#allocation6 + $0x38] sm:$0xff]
    %v94 = vld [vmem:[#allocation6 + $0x40] sm:$0xff]
    %v95 = vld [vmem:[#allocation6 + $0x48] sm:$0xff]
    %v96 = vld [vmem:[#allocation6 + $0x50] sm:$0xff]
    %v97 = vld [vmem:[#allocation6 + $0x58] sm:$0xff]
    %v98 = vld [vmem:[#allocation6 + $0x60] sm:$0xff]
    %v99 = vld [vmem:[#allocation6 + $0x68] sm:$0xff]
    %v100 = vld [vmem:[#allocation6 + $0x70] sm:$0xff]
    %v101 = vld [vmem:[#allocation6 + $0x78] sm:$0xff]
    %v102 = vld [vmem:[%s2] sm:$0x1]
    %v104 = vlaneseq
    %v105 = vshrl.u32 %v104, 7
    %v106 = vsub.s32 0, %v105
    %v107 = vrot.slane %v102, %v106
    %109 = vmatprep.subr.mxu0 0.0
    %110 = vmatpush1.msra.mxu0 %v86
    %111 = vmatprep.subr.mxu0 0.0
    %112 = vmatpush1.msra.mxu0 %v87
    %113 = vmatprep.subr.mxu0 0.0
    %114 = vmatpush1.msra.mxu0 %v88
    %115 = vmatprep.subr.mxu0 0.0
    %116 = vmatpush1.msra.mxu0 %v89
    %117 = vmatprep.subr.mxu0 0.0
    %118 = vmatpush1.msra.mxu0 %v90
    %119 = vmatprep.subr.mxu0 0.0
    %120 = vmatpush1.msra.mxu0 %v91
    %121 = vmatprep.subr.mxu0 0.0
    %122 = vmatpush1.msra.mxu0 %v92
    %123 = vmatprep.subr.mxu0 0.0
    %124 = vmatpush1.msra.mxu0 %v93
    %125 = vmatprep.subr.mxu0 0.0
    %126 = vmatpush1.msra.mxu0 %v94
    %127 = vmatprep.subr.mxu0 0.0
    %128 = vmatpush1.msra.mxu0 %v95
    %129 = vmatprep.subr.mxu0 0.0
    %130 = vmatpush1.msra.mxu0 %v96
    %131 = vmatprep.subr.mxu0 0.0
    %132 = vmatpush1.msra.mxu0 %v97
    %133 = vmatprep.subr.mxu0 0.0
    %134 = vmatpush1.msra.mxu0 %v98
    %135 = vmatprep.subr.mxu0 0.0
    %136 = vmatpush1.msra.mxu0 %v99
    %137 = vmatprep.subr.mxu0 0.0
    %138 = vmatpush1.msra.mxu0 %v100
    %139 = vmatprep.subr.mxu0 0.0
    %140 = vmatpush1.msra.mxu0 %v101
    %141 = vmatprep.subr.mxu0 0.0
    %142 = vmatpush1.msra.mxu0 0.0
    %143 = vmatprep.subr.mxu0 0.0
    %144 = vmatpush1.msra.mxu0 0.0
    %145 = vmatprep.subr.mxu0 0.0
    %146 = vmatpush1.msra.mxu0 0.0
    %147 = vmatprep.subr.mxu0 0.0
    %148 = vmatpush1.msra.mxu0 0.0
    %149 = vmatprep.subr.mxu0 0.0
    %150 = vmatpush1.msra.mxu0 0.0
    %151 = vmatprep.subr.mxu0 0.0
    %152 = vmatpush1.msra.mxu0 0.0
    %153 = vmatprep.subr.mxu0 0.0
    %154 = vmatpush1.msra.mxu0 0.0
    %155 = vmatprep.subr.mxu0 0.0
    %156 = vmatpush1.msra.mxu0 0.0
    %157 = vmatprep.subr.mxu0 0.0
    %158 = vmatpush1.msra.mxu0 0.0
    %159 = vmatprep.subr.mxu0 0.0
    %160 = vmatpush1.msra.mxu0 0.0
    %161 = vmatprep.subr.mxu0 0.0
    %162 = vmatpush1.msra.mxu0 0.0
    %163 = vmatprep.subr.mxu0 0.0
    %164 = vmatpush1.msra.mxu0 0.0
    %165 = vmatprep.subr.mxu0 0.0
    %166 = vmatpush1.msra.mxu0 0.0
    %167 = vmatprep.subr.mxu0 0.0
    %168 = vmatpush1.msra.mxu0 0.0
    %169 = vmatprep.subr.mxu0 0.0
    %170 = vmatpush1.msra.mxu0 0.0
    %171 = vmatprep.subr.mxu0 0.0
    %172 = vmatpush1.msra.mxu0 0.0
    %173 = vmatprep.mubr.f32.mxu0 0.0
    %174 = vmatmul.mubr.f32.gmra.mrb[0].mxu0 %v82
    %v175 = vpop.f32.mrb[0].mxu0
    %v176 = vadd.f32 %v107, %v175
    %v177 = vpop.f32.mrb[0].mxu0
    %178 = vmatprep.mubr.f32.mxu0 0.0
    %179 = vmatmul.mubr.f32.gmra.mrb[0].mxu0 %v83
    %v180 = vpop.f32.mrb[0].mxu0
    %v181 = vadd.f32 %v107, %v180
    %v182 = vpop.f32.mrb[0].mxu0
    %183 = vmatprep.mubr.f32.mxu0 0.0
    %184 = vmatmul.mubr.f32.gmra.mrb[0].mxu0 %v84
    %v185 = vpop.f32.mrb[0].mxu0
    %v186 = vadd.f32 %v107, %v185
    %v187 = vpop.f32.mrb[0].mxu0
    %188 = vmatprep.mubr.f32.mxu0 0.0
    %189 = vmatmul.mubr.f32.gmra.mrb[0].mxu0 %v85
    %v190 = vpop.f32.mrb[0].mxu0
    %v191 = vadd.f32 %v107, %v190
    %v192 = vpop.f32.mrb[0].mxu0
    %193 = vdwg.mxu0
    %v194 = vmax.f32 %v176, 0.0
    %v195 = vmax.f32 %v181, 0.0
    %v196 = vmax.f32 %v186, 0.0
    %v197 = vmax.f32 %v191, 0.0
    %v198 = vlaneseq
    %v199 = vand.u32 %v198, 127
    %200 = vrot.lane.b32.xlu0 %v194, 24
    %v201 = vpop.permute.xlu0 %200
    %202 = vrot.lane.b32.xlu0 %v195, 24
    %v203 = vpop.permute.xlu0 %202
    %204 = vrot.lane.b32.xlu0 %v196, 24
    %v205 = vpop.permute.xlu0 %204
    %206 = vrot.lane.b32.xlu0 %v197, 24
    %v207 = vpop.permute.xlu0 %206
    %vm208 = vcmp.ge.s32.totalorder %v199, 24
    %v209 = vsel %vm208, %v201, 0.0
    %v210 = vsel %vm208, %v203, 0.0
    %v211 = vsel %vm208, %v205, 0.0
    %v212 = vsel %vm208, %v207, 0.0
    %213 = vrot.lane.b32.xlu0 %v194, 16
    %v214 = vpop.permute.xlu0 %213
    %215 = vrot.lane.b32.xlu0 %v195, 16
    %v216 = vpop.permute.xlu0 %215
    %217 = vrot.lane.b32.xlu0 %v196, 16
    %v218 = vpop.permute.xlu0 %217
    %219 = vrot.lane.b32.xlu0 %v197, 16
    %v220 = vpop.permute.xlu0 %219
    %vm221 = vcmp.ge.s32.totalorder %v199, 16
    %v222 = vsel %vm221, %v214, 0.0
    %v223 = vsel %vm221, %v216, 0.0
    %v224 = vsel %vm221, %v218, 0.0
    %v225 = vsel %vm221, %v220, 0.0
    %226 = vrot.lane.b32.xlu0 %v194, 8
    %v227 = vpop.permute.xlu0 %226
    %228 = vrot.lane.b32.xlu0 %v195, 8
    %v229 = vpop.permute.xlu0 %228
    %230 = vrot.lane.b32.xlu0 %v196, 8
    %v231 = vpop.permute.xlu0 %230
    %232 = vrot.lane.b32.xlu0 %v197, 8
    %v233 = vpop.permute.xlu0 %232
    %vm234 = vcmp.ge.s32.totalorder %v199, 8
    %v235 = vsel %vm234, %v227, 0.0
    %v236 = vsel %vm234, %v229, 0.0
    %v237 = vsel %vm234, %v231, 0.0
    %v238 = vsel %vm234, %v233, 0.0
    %239 = vrot.lane.b32.xlu0 %v194, 120
    %v240 = vpop.permute.xlu0 %239
    %241 = vrot.lane.b32.xlu0 %v195, 120
    %v242 = vpop.permute.xlu0 %241
    %243 = vrot.lane.b32.xlu0 %v196, 120
    %v244 = vpop.permute.xlu0 %243
    %245 = vrot.lane.b32.xlu0 %v197, 120
    %v246 = vpop.permute.xlu0 %245
    %vm247 = vcmp.lt.s32.totalorder %v199, 120
    %v248 = vsel %vm247, %v240, 0.0
    %v249 = vsel %vm247, %v242, 0.0
    %v250 = vsel %vm247, %v244, 0.0
    %v251 = vsel %vm247, %v246, 0.0
    %252 = vrot.lane.b32.xlu0 %v194, 112
    %v253 = vpop.permute.xlu0 %252
    %254 = vrot.lane.b32.xlu0 %v195, 112
    %v255 = vpop.permute.xlu0 %254
    %256 = vrot.lane.b32.xlu0 %v196, 112
    %v257 = vpop.permute.xlu0 %256
    %258 = vrot.lane.b32.xlu0 %v197, 112
    %v259 = vpop.permute.xlu0 %258
    %vm260 = vcmp.lt.s32.totalorder %v199, 112
    %v261 = vsel %vm260, %v253, 0.0
    %v262 = vsel %vm260, %v255, 0.0
    %v263 = vsel %vm260, %v257, 0.0
    %v264 = vsel %vm260, %v259, 0.0
    %265 = vrot.lane.b32.xlu0 %v194, 104
    %v266 = vpop.permute.xlu0 %265
    %267 = vrot.lane.b32.xlu0 %v195, 104
    %v268 = vpop.permute.xlu0 %267
    %269 = vrot.lane.b32.xlu0 %v196, 104
    %v270 = vpop.permute.xlu0 %269
    %271 = vrot.lane.b32.xlu0 %v197, 104
    %v272 = vpop.permute.xlu0 %271
    %vm273 = vcmp.lt.s32.totalorder %v199, 104
    %v274 = vsel %vm273, %v266, 0.0
    %v275 = vsel %vm273, %v268, 0.0
    %v276 = vsel %vm273, %v270, 0.0
    %v277 = vsel %vm273, %v272, 0.0
    %278 = vst [vmem:[#allocation2] sm:$0xff] 0.0
    %279 = vst [vmem:[#allocation2 + $0x8] sm:$0xff] 0.0
    %280 = vst [vmem:[#allocation2 + $0x10] sm:$0xff] 0.0
    %281 = vst [vmem:[#allocation2 + $0x18] sm:$0xff] 0.0
    %282 = vst [vmem:[#allocation2 + $0x20] sm:$0xff] 0.0
    %283 = vst [vmem:[#allocation2 + $0x28] sm:$0xff] 0.0
    %284 = vst [vmem:[#allocation2 + $0x30] sm:$0xff] 0.0
    %285 = vst [vmem:[#allocation2 + $0xa8] sm:$0xff] 0.0
    %286 = vst [vmem:[#allocation2 + $0xb0] sm:$0xff] 0.0
    %287 = vst [vmem:[#allocation2 + $0xb8] sm:$0xff] 0.0
    %288 = vst [vmem:[#allocation2 + $0xc0] sm:$0xff] 0.0
    %289 = vst [vmem:[#allocation2 + $0xc8] sm:$0xff] 0.0
    %290 = vst [vmem:[#allocation2 + $0xd0] sm:$0xff] 0.0
    %291 = vst [vmem:[#allocation2 + $0xd8] sm:$0xff] 0.0
    %292 = vst [vmem:[#allocation2 + $0x38] sm:$0xff] %v209
    %293 = vst [vmem:[#allocation2 + $0x40] sm:$0xff] %v222
    %294 = vst [vmem:[#allocation2 + $0x48] sm:$0xff] %v235
    %295 = vst [vmem:[#allocation2 + $0x50] sm:$0xff] %v194
    %296 = vst [vmem:[#allocation2 + $0x58] sm:$0xff] %v248
    %297 = vst [vmem:[#allocation2 + $0x60] sm:$0xff] %v261
    %298 = vst [vmem:[#allocation2 + $0x68] sm:$0xff] %v274
    %299 = vst [vmem:[#allocation2 + $0x70] sm:$0xff] %v210
    %300 = vst [vmem:[#allocation2 + $0x78] sm:$0xff] %v223
    %301 = vst [vmem:[#allocation2 + $0x80] sm:$0xff] %v236
    %302 = vst [vmem:[#allocation2 + $0x88] sm:$0xff] %v195
    %303 = vst [vmem:[#allocation2 + $0x90] sm:$0xff] %v249
    %304 = vst [vmem:[#allocation2 + $0x98] sm:$0xff] %v262
    %305 = vst [vmem:[#allocation2 + $0xa0] sm:$0xff] %v275
    %s306 = scalar_lea.vmem [#allocation2], 224
    %307 = vst [vmem:[%s306] sm:$0xff] 0.0
    %308 = vst [vmem:[%s306 + $0x8] sm:$0xff] 0.0
    %309 = vst [vmem:[%s306 + $0x10] sm:$0xff] 0.0
    %310 = vst [vmem:[%s306 + $0x18] sm:$0xff] 0.0
    %311 = vst [vmem:[%s306 + $0x20] sm:$0xff] 0.0
    %312 = vst [vmem:[%s306 + $0x28] sm:$0xff] 0.0
    %313 = vst [vmem:[%s306 + $0x30] sm:$0xff] 0.0
    %314 = vst [vmem:[%s306 + $0xa8] sm:$0xff] 0.0
    %315 = vst [vmem:[%s306 + $0xb0] sm:$0xff] 0.0
    %316 = vst [vmem:[%s306 + $0xb8] sm:$0xff] 0.0
    %317 = vst [vmem:[%s306 + $0xc0] sm:$0xff] 0.0
    %318 = vst [vmem:[%s306 + $0xc8] sm:$0xff] 0.0
    %319 = vst [vmem:[%s306 + $0xd0] sm:$0xff] 0.0
    %320 = vst [vmem:[%s306 + $0xd8] sm:$0xff] 0.0
    %321 = vst [vmem:[%s306 + $0x38] sm:$0xff] %v211
    %322 = vst [vmem:[%s306 + $0x40] sm:$0xff] %v224
    %323 = vst [vmem:[%s306 + $0x48] sm:$0xff] %v237
    %324 = vst [vmem:[%s306 + $0x50] sm:$0xff] %v196
    %325 = vst [vmem:[%s306 + $0x58] sm:$0xff] %v250
    %326 = vst [vmem:[%s306 + $0x60] sm:$0xff] %v263
    %327 = vst [vmem:[%s306 + $0x68] sm:$0xff] %v276
    %328 = vst [vmem:[%s306 + $0x70] sm:$0xff] %v212
    %329 = vst [vmem:[%s306 + $0x78] sm:$0xff] %v225
    %330 = vst [vmem:[%s306 + $0x80] sm:$0xff] %v238
    %331 = vst [vmem:[%s306 + $0x88] sm:$0xff] %v197
    %332 = vst [vmem:[%s306 + $0x90] sm:$0xff] %v251
    %333 = vst [vmem:[%s306 + $0x98] sm:$0xff] %v264
    %334 = vst [vmem:[%s306 + $0xa0] sm:$0xff] %v277
    %v335 = vld [vmem:[#allocation2] sm:$0xe0]
    %v336 = vld [vmem:[#allocation2 + $0x8] sm:$0xe0]
    %v337 = vld [vmem:[#allocation2 + $0x10] sm:$0xe0]
    %v338 = vld [vmem:[#allocation2 + $0x18] sm:$0xe0]
    %v339 = vld [vmem:[#allocation2 + $0x20] sm:$0xe0]
    %v340 = vld [vmem:[#allocation2 + $0x28] sm:$0xe0]
    %v341 = vld [vmem:[#allocation2 + $0x30] sm:$0xe0]
    %v342 = vld [vmem:[#allocation2 + $0x38] sm:$0xff]
    %v343 = vld [vmem:[#allocation2 + $0x40] sm:$0xff]
    %v344 = vld [vmem:[#allocation2 + $0x48] sm:$0xff]
    %v345 = vld [vmem:[#allocation2 + $0x50] sm:$0xff]
    %v346 = vld [vmem:[#allocation2 + $0x58] sm:$0xff]
    %v347 = vld [vmem:[#allocation2 + $0x60] sm:$0xff]
    %v348 = vld [vmem:[#allocation2 + $0x68] sm:$0xff]
    %v349 = vld [vmem:[#allocation2 + $0x70] sm:$0x1f]
    %v350 = vld [vmem:[#allocation2 + $0x78] sm:$0x1f]
    %v351 = vld [vmem:[#allocation2 + $0x80] sm:$0x1f]
    %v352 = vld [vmem:[#allocation2 + $0x88] sm:$0x1f]
    %v353 = vld [vmem:[#allocation2 + $0x90] sm:$0x1f]
    %v354 = vld [vmem:[#allocation2 + $0x98] sm:$0x1f]
    %v355 = vld [vmem:[#allocation2 + $0xa0] sm:$0x1f]
    %v356 = vld [vmem:[#allocation8] sm:$0x1]
    %v357 = vlaneseq
    %v358 = vshrl.u32 %v357, 7
    %v359 = vsub.s32 0, %v358
    %v360 = vrot.slane %v356, %v359
    %v361 = vmul.f32 %v335, %v360
    %v362 = vmul.f32 %v342, %v360
    %v363 = vmul.f32 %v349, %v360
    %v364 = vld [vmem:[#allocation8 + $0x1] sm:$0x1]
    %v365 = vlaneseq
    %v366 = vshrl.u32 %v365, 7
    %v367 = vsub.s32 0, %v366
    %v368 = vrot.slane %v364, %v367
    %v369 = vmul.f32 %v336, %v368
    %v370 = vmul.f32 %v343, %v368
    %v371 = vmul.f32 %v350, %v368
    %v372 = vld [vmem:[#allocation8 + $0x2] sm:$0x1]
    %v373 = vlaneseq
    %v374 = vshrl.u32 %v373, 7
    %v375 = vsub.s32 0, %v374
    %v376 = vrot.slane %v372, %v375
    %v377 = vmul.f32 %v337, %v376
    %v378 = vmul.f32 %v344, %v376
    %v379 = vmul.f32 %v351, %v376
    %v380 = vadd.f32 %v361, %v377
    %v381 = vadd.f32 %v362, %v378
    %v382 = vadd.f32 %v363, %v379
    %v383 = vld [vmem:[#allocation8 + $0x3] sm:$0x1]
    %v384 = vlaneseq
    %v385 = vshrl.u32 %v384, 7
    %v386 = vsub.s32 0, %v385
    %v387 = vrot.slane %v383, %v386
    %v388 = vmul.f32 %v338, %v387
    %v389 = vmul.f32 %v345, %v387
    %v390 = vmul.f32 %v352, %v387
    %v391 = vadd.f32 %v369, %v388
    %v392 = vadd.f32 %v370, %v389
    %v393 = vadd.f32 %v371, %v390
    %v394 = vld [vmem:[#allocation8 + $0x4] sm:$0x1]
    %v395 = vlaneseq
    %v396 = vshrl.u32 %v395, 7
    %v397 = vsub.s32 0, %v396
    %v398 = vrot.slane %v394, %v397
    %v399 = vmul.f32 %v339, %v398
    %v400 = vmul.f32 %v346, %v398
    %v401 = vmul.f32 %v353, %v398
    %v402 = vadd.f32 %v380, %v399
    %v403 = vadd.f32 %v381, %v400
    %v404 = vadd.f32 %v382, %v401
    %v405 = vld [vmem:[#allocation8 + $0x5] sm:$0x1]
    %v406 = vlaneseq
    %v407 = vshrl.u32 %v406, 7
    %v408 = vsub.s32 0, %v407
    %v409 = vrot.slane %v405, %v408
    %v410 = vmul.f32 %v340, %v409
    %v411 = vmul.f32 %v347, %v409
    %v412 = vmul.f32 %v354, %v409
    %v413 = vadd.f32 %v391, %v410
    %v414 = vadd.f32 %v392, %v411
    %v415 = vadd.f32 %v393, %v412
    %v416 = vld [vmem:[#allocation8 + $0x6] sm:$0x1]
    %v417 = vlaneseq
    %v418 = vshrl.u32 %v417, 7
    %v419 = vsub.s32 0, %v418
    %v420 = vrot.slane %v416, %v419
    %v421 = vmul.f32 %v341, %v420
    %v422 = vmul.f32 %v348, %v420
    %v423 = vmul.f32 %v355, %v420
    %v424 = vadd.f32 %v402, %v421
    %v425 = vadd.f32 %v403, %v422
    %v426 = vadd.f32 %v404, %v423
    %v427 = vadd.f32 %v424, %v413
    %v428 = vadd.f32 %v425, %v414
    %v429 = vadd.f32 %v426, %v415
    %v430 = vld [vmem:[#allocation2] sm:$0xc0]
    %v431 = vld [vmem:[#allocation2 + $0x8] sm:$0xc0]
    %v432 = vld [vmem:[#allocation2 + $0x10] sm:$0xc0]
    %v433 = vld [vmem:[#allocation2 + $0x18] sm:$0xc0]
    %v434 = vld [vmem:[#allocation2 + $0x20] sm:$0xc0]
    %v435 = vld [vmem:[#allocation2 + $0x28] sm:$0xc0]
    %v436 = vld [vmem:[#allocation2 + $0x30] sm:$0xc0]
    %v437 = vld [vmem:[#allocation2 + $0x70] sm:$0x3f]
    %v438 = vld [vmem:[#allocation2 + $0x78] sm:$0x3f]
    %v439 = vld [vmem:[#allocation2 + $0x80] sm:$0x3f]
    %v440 = vld [vmem:[#allocation2 + $0x88] sm:$0x3f]
    %v441 = vld [vmem:[#allocation2 + $0x90] sm:$0x3f]
    %v442 = vld [vmem:[#allocation2 + $0x98] sm:$0x3f]
    %v443 = vld [vmem:[#allocation2 + $0xa0] sm:$0x3f]
    %v444 = vld [vmem:[#allocation8 + $0x7] sm:$0x1]
    %v445 = vlaneseq
    %v446 = vshrl.u32 %v445, 7
    %v447 = vsub.s32 0, %v446
    %v448 = vrot.slane %v444, %v447
    %v449 = vmul.f32 %v430, %v448
    %v450 = vmul.f32 %v342, %v448
    %v451 = vmul.f32 %v437, %v448
    %v452 = vld [vmem:[#allocation8 + $0x8] sm:$0x1]
    %v453 = vlaneseq
    %v454 = vshrl.u32 %v453, 7
    %v455 = vsub.s32 0, %v454
    %v456 = vrot.slane %v452, %v455
    %v457 = vmul.f32 %v431, %v456
    %v458 = vmul.f32 %v343, %v456
    %v459 = vmul.f32 %v438, %v456
    %v460 = vld [vmem:[#allocation8 + $0x9] sm:$0x1]
    %v461 = vlaneseq
    %v462 = vshrl.u32 %v461, 7
    %v463 = vsub.s32 0, %v462
    %v464 = vrot.slane %v460, %v463
    %v465 = vmul.f32 %v432, %v464
    %v466 = vmul.f32 %v344, %v464
    %v467 = vmul.f32 %v439, %v464
    %v468 = vadd.f32 %v449, %v465
    %v469 = vadd.f32 %v450, %v466
    %v470 = vadd.f32 %v451, %v467
    %v471 = vld [vmem:[#allocation8 + $0xa] sm:$0x1]
    %v472 = vlaneseq
    %v473 = vshrl.u32 %v472, 7
    %v474 = vsub.s32 0, %v473
    %v475 = vrot.slane %v471, %v474
    %v476 = vmul.f32 %v433, %v475
    %v477 = vmul.f32 %v345, %v475
    %v478 = vmul.f32 %v440, %v475
    %v479 = vadd.f32 %v457, %v476
    %v480 = vadd.f32 %v458, %v477
    %v481 = vadd.f32 %v459, %v478
    %v482 = vld [vmem:[#allocation8 + $0xb] sm:$0x1]
    %v483 = vlaneseq
    %v484 = vshrl.u32 %v483, 7
    %v485 = vsub.s32 0, %v484
    %v486 = vrot.slane %v482, %v485
    %v487 = vmul.f32 %v434, %v486
    %v488 = vmul.f32 %v346, %v486
    %v489 = vmul.f32 %v441, %v486
    %v490 = vadd.f32 %v468, %v487
    %v491 = vadd.f32 %v469, %v488
    %v492 = vadd.f32 %v470, %v489
    %v493 = vld [vmem:[#allocation8 + $0xc] sm:$0x1]
    %v494 = vlaneseq
    %v495 = vshrl.u32 %v494, 7
    %v496 = vsub.s32 0, %v495
    %v497 = vrot.slane %v493, %v496
    %v498 = vmul.f32 %v435, %v497
    %v499 = vmul.f32 %v347, %v497
    %v500 = vmul.f32 %v442, %v497
    %v501 = vadd.f32 %v479, %v498
    %v502 = vadd.f32 %v480, %v499
    %v503 = vadd.f32 %v481, %v500
    %v504 = vld [vmem:[#allocation8 + $0xd] sm:$0x1]
    %v505 = vlaneseq
    %v506 = vshrl.u32 %v505, 7
    %v507 = vsub.s32 0, %v506
    %v508 = vrot.slane %v504, %v507
    %v509 = vmul.f32 %v436, %v508
    %v510 = vmul.f32 %v348, %v508
    %v511 = vmul.f32 %v443, %v508
    %v512 = vadd.f32 %v490, %v509
    %v513 = vadd.f32 %v491, %v510
    %v514 = vadd.f32 %v492, %v511
    %v515 = vadd.f32 %v512, %v501
    %v516 = vadd.f32 %v513, %v502
    %v517 = vadd.f32 %v514, %v503
    %v518 = vld [vmem:[#allocation2] sm:$0x80]
    %v519 = vld [vmem:[#allocation2 + $0x8] sm:$0x80]
    %v520 = vld [vmem:[#allocation2 + $0x10] sm:$0x80]
    %v521 = vld [vmem:[#allocation2 + $0x18] sm:$0x80]
    %v522 = vld [vmem:[#allocation2 + $0x20] sm:$0x80]
    %v523 = vld [vmem:[#allocation2 + $0x28] sm:$0x80]
    %v524 = vld [vmem:[#allocation2 + $0x30] sm:$0x80]
    %v525 = vld [vmem:[#allocation2 + $0x70] sm:$0x7f]
    %v526 = vld [vmem:[#allocation2 + $0x78] sm:$0x7f]
    %v527 = vld [vmem:[#allocation2 + $0x80] sm:$0x7f]
    %v528 = vld [vmem:[#allocation2 + $0x88] sm:$0x7f]
    %v529 = vld [vmem:[#allocation2 + $0x90] sm:$0x7f]
    %v530 = vld [vmem:[#allocation2 + $0x98] sm:$0x7f]
    %v531 = vld [vmem:[#allocation2 + $0xa0] sm:$0x7f]
    %v532 = vld [vmem:[#allocation8 + $0xe] sm:$0x1]
    %v533 = vlaneseq
    %v534 = vshrl.u32 %v533, 7
    %v535 = vsub.s32 0, %v534
    %v536 = vrot.slane %v532, %v535
    %v537 = vmul.f32 %v518, %v536
    %v538 = vmul.f32 %v342, %v536
    %v539 = vmul.f32 %v525, %v536
    %v540 = vld [vmem:[#allocation8 + $0xf] sm:$0x1]
    %v541 = vlaneseq
    %v542 = vshrl.u32 %v541, 7
    %v543 = vsub.s32 0, %v542
    %v544 = vrot.slane %v540, %v543
    %v545 = vmul.f32 %v519, %v544
    %v546 = vmul.f32 %v343, %v544
    %v547 = vmul.f32 %v526, %v544
    %v548 = vld [vmem:[#allocation8 + $0x10] sm:$0x1]
    %v549 = vlaneseq
    %v550 = vshrl.u32 %v549, 7
    %v551 = vsub.s32 0, %v550
    %v552 = vrot.slane %v548, %v551
    %v553 = vmul.f32 %v520, %v552
    %v554 = vmul.f32 %v344, %v552
    %v555 = vmul.f32 %v527, %v552
    %v556 = vadd.f32 %v537, %v553
    %v557 = vadd.f32 %v538, %v554
    %v558 = vadd.f32 %v539, %v555
    %v559 = vld [vmem:[#allocation8 + $0x11] sm:$0x1]
    %v560 = vlaneseq
    %v561 = vshrl.u32 %v560, 7
    %v562 = vsub.s32 0, %v561
    %v563 = vrot.slane %v559, %v562
    %v564 = vmul.f32 %v521, %v563
    %v565 = vmul.f32 %v345, %v563
    %v566 = vmul.f32 %v528, %v563
    %v567 = vadd.f32 %v545, %v564
    %v568 = vadd.f32 %v546, %v565
    %v569 = vadd.f32 %v547, %v566
    %v570 = vld [vmem:[#allocation8 + $0x12] sm:$0x1]
    %v571 = vlaneseq
    %v572 = vshrl.u32 %v571, 7
    %v573 = vsub.s32 0, %v572
    %v574 = vrot.slane %v570, %v573
    %v575 = vmul.f32 %v522, %v574
    %v576 = vmul.f32 %v346, %v574
    %v577 = vmul.f32 %v529, %v574
    %v578 = vadd.f32 %v556, %v575
    %v579 = vadd.f32 %v557, %v576
    %v580 = vadd.f32 %v558, %v577
    %v581 = vld [vmem:[#allocation8 + $0x13] sm:$0x1]
    %v582 = vlaneseq
    %v583 = vshrl.u32 %v582, 7
    %v584 = vsub.s32 0, %v583
    %v585 = vrot.slane %v581, %v584
    %v586 = vmul.f32 %v523, %v585
    %v587 = vmul.f32 %v347, %v585
    %v588 = vmul.f32 %v530, %v585
    %v589 = vadd.f32 %v567, %v586
    %v590 = vadd.f32 %v568, %v587
    %v591 = vadd.f32 %v569, %v588
    %v592 = vld [vmem:[#allocation8 + $0x14] sm:$0x1]
    %v593 = vlaneseq
    %v594 = vshrl.u32 %v593, 7
    %v595 = vsub.s32 0, %v594
    %v596 = vrot.slane %v592, %v595
    %v597 = vmul.f32 %v524, %v596
    %v598 = vmul.f32 %v348, %v596
    %v599 = vmul.f32 %v531, %v596
    %v600 = vadd.f32 %v578, %v597
    %v601 = vadd.f32 %v579, %v598
    %v602 = vadd.f32 %v580, %v599
    %v603 = vadd.f32 %v600, %v589
    %v604 = vadd.f32 %v601, %v590
    %v605 = vadd.f32 %v602, %v591
    %vm609 = vcmask 1045504
    %v610 = vrot.slane %v603, 2
    %v611 = vrot.slane %v604, 2
    %v612 = vsel %vm609, %v610, %v611
    %v613 = vrot.slane %v605, 2
    %v614 = vsel %vm609, %v611, %v613
    %v618 = vadd.f32 %v427, %v612
    %v619 = vadd.f32 %v428, %v614
    %v620 = vadd.f32 %v429, %v613
    %v621 = vld [vmem:[#allocation2 + $0x70] sm:$0xff]
    %v622 = vld [vmem:[#allocation2 + $0x78] sm:$0xff]
    %v623 = vld [vmem:[#allocation2 + $0x80] sm:$0xff]
    %v624 = vld [vmem:[#allocation2 + $0x88] sm:$0xff]
    %v625 = vld [vmem:[#allocation2 + $0x90] sm:$0xff]
    %v626 = vld [vmem:[#allocation2 + $0x98] sm:$0xff]
    %v627 = vld [vmem:[#allocation2 + $0xa0] sm:$0xff]
    %v628 = vld [vmem:[#allocation8 + $0x15] sm:$0x1]
    %v629 = vlaneseq
    %v630 = vshrl.u32 %v629, 7
    %v631 = vsub.s32 0, %v630
    %v632 = vrot.slane %v628, %v631
    %v633 = vmul.f32 %v342, %v632
    %v634 = vmul.f32 %v621, %v632
    %v635 = vld [vmem:[#allocation8 + $0x16] sm:$0x1]
    %v636 = vlaneseq
    %v637 = vshrl.u32 %v636, 7
    %v638 = vsub.s32 0, %v637
    %v639 = vrot.slane %v635, %v638
    %v640 = vmul.f32 %v343, %v639
    %v641 = vmul.f32 %v622, %v639
    %v642 = vld [vmem:[#allocation8 + $0x17] sm:$0x1]
    %v643 = vlaneseq
    %v644 = vshrl.u32 %v643, 7
    %v645 = vsub.s32 0, %v644
    %v646 = vrot.slane %v642, %v645
    %v647 = vmul.f32 %v344, %v646
    %v648 = vmul.f32 %v623, %v646
    %v649 = vadd.f32 %v633, %v647
    %v650 = vadd.f32 %v634, %v648
    %v651 = vld [vmem:[#allocation8 + $0x18] sm:$0x1]
    %v652 = vlaneseq
    %v653 = vshrl.u32 %v652, 7
    %v654 = vsub.s32 0, %v653
    %v655 = vrot.slane %v651, %v654
    %v656 = vmul.f32 %v345, %v655
    %v657 = vmul.f32 %v624, %v655
    %v658 = vadd.f32 %v640, %v656
    %v659 = vadd.f32 %v641, %v657
    %v660 = vld [vmem:[#allocation8 + $0x19] sm:$0x1]
    %v661 = vlaneseq
    %v662 = vshrl.u32 %v661, 7
    %v663 = vsub.s32 0, %v662
    %v664 = vrot.slane %v660, %v663
    %v665 = vmul.f32 %v346, %v664
    %v666 = vmul.f32 %v625, %v664
    %v667 = vadd.f32 %v649, %v665
    %v668 = vadd.f32 %v650, %v666
    %v669 = vld [vmem:[#allocation8 + $0x1a] sm:$0x1]
    %v670 = vlaneseq
    %v671 = vshrl.u32 %v670, 7
    %v672 = vsub.s32 0, %v671
    %v673 = vrot.slane %v669, %v672
    %v674 = vmul.f32 %v347, %v673
    %v675 = vmul.f32 %v626, %v673
    %v676 = vadd.f32 %v658, %v674
    %v677 = vadd.f32 %v659, %v675
    %v678 = vld [vmem:[#allocation8 + $0x1b] sm:$0x1]
    %v679 = vlaneseq
    %v680 = vshrl.u32 %v679, 7
    %v681 = vsub.s32 0, %v680
    %v682 = vrot.slane %v678, %v681
    %v683 = vmul.f32 %v348, %v682
    %v684 = vmul.f32 %v627, %v682
    %v685 = vadd.f32 %v667, %v683
    %v686 = vadd.f32 %v668, %v684
    %v687 = vadd.f32 %v685, %v676
    %v688 = vadd.f32 %v686, %v677
    %v691 = vrot.slane %v687, 2
    %v692 = vrot.slane %v688, 2
    %v693 = vsel %vm609, %v691, %v692
    %v697 = vadd.f32 %v515, %v691
    %v698 = vadd.f32 %v516, %v693
    %v699 = vadd.f32 %v517, %v692
    %v700 = vld [vmem:[#allocation2 + $0x38] sm:$0xfe]
    %v701 = vld [vmem:[#allocation2 + $0x40] sm:$0xfe]
    %v702 = vld [vmem:[#allocation2 + $0x48] sm:$0xfe]
    %v703 = vld [vmem:[#allocation2 + $0x50] sm:$0xfe]
    %v704 = vld [vmem:[#allocation2 + $0x58] sm:$0xfe]
    %v705 = vld [vmem:[#allocation2 + $0x60] sm:$0xfe]
    %v706 = vld [vmem:[#allocation2 + $0x68] sm:$0xfe]
    %v707 = vld [vmem:[#allocation2 + $0xa8] sm:$0x1]
    %v708 = vld [vmem:[#allocation2 + $0xb0] sm:$0x1]
    %v709 = vld [vmem:[#allocation2 + $0xb8] sm:$0x1]
    %v710 = vld [vmem:[#allocation2 + $0xc0] sm:$0x1]
    %v711 = vld [vmem:[#allocation2 + $0xc8] sm:$0x1]
    %v712 = vld [vmem:[#allocation2 + $0xd0] sm:$0x1]
    %v713 = vld [vmem:[#allocation2 + $0xd8] sm:$0x1]
    %v714 = vld [vmem:[#allocation8 + $0x1c] sm:$0x1]
    %v715 = vlaneseq
    %v716 = vshrl.u32 %v715, 7
    %v717 = vsub.s32 0, %v716
    %v718 = vrot.slane %v714, %v717
    %v719 = vmul.f32 %v700, %v718
    %v720 = vmul.f32 %v621, %v718
    %v721 = vmul.f32 %v707, %v718
    %v722 = vld [vmem:[#allocation8 + $0x1d] sm:$0x1]
    %v723 = vlaneseq
    %v724 = vshrl.u32 %v723, 7
    %v725 = vsub.s32 0, %v724
    %v726 = vrot.slane %v722, %v725
    %v727 = vmul.f32 %v701, %v726
    %v728 = vmul.f32 %v622, %v726
    %v729 = vmul.f32 %v708, %v726
    %v730 = vld [vmem:[#allocation8 + $0x1e] sm:$0x1]
    %v731 = vlaneseq
    %v732 = vshrl.u32 %v731, 7
    %v733 = vsub.s32 0, %v732
    %v734 = vrot.slane %v730, %v733
    %v735 = vmul.f32 %v702, %v734
    %v736 = vmul.f32 %v623, %v734
    %v737 = vmul.f32 %v709, %v734
    %v738 = vadd.f32 %v719, %v735
    %v739 = vadd.f32 %v720, %v736
    %v740 = vadd.f32 %v721, %v737
    %v741 = vld [vmem:[#allocation8 + $0x1f] sm:$0x1]
    %v742 = vlaneseq
    %v743 = vshrl.u32 %v742, 7
    %v744 = vsub.s32 0, %v743
    %v745 = vrot.slane %v741, %v744
    %v746 = vmul.f32 %v703, %v745
    %v747 = vmul.f32 %v624, %v745
    %v748 = vmul.f32 %v710, %v745
    %v749 = vadd.f32 %v727, %v746
    %v750 = vadd.f32 %v728, %v747
    %v751 = vadd.f32 %v729, %v748
    %v752 = vld [vmem:[#allocation8 + $0x20] sm:$0x1]
    %v753 = vlaneseq
    %v754 = vshrl.u32 %v753, 7
    %v755 = vsub.s32 0, %v754
    %v756 = vrot.slane %v752, %v755
    %v757 = vmul.f32 %v704, %v756
    %v758 = vmul.f32 %v625, %v756
    %v759 = vmul.f32 %v711, %v756
    %v760 = vadd.f32 %v738, %v757
    %v761 = vadd.f32 %v739, %v758
    %v762 = vadd.f32 %v740, %v759
    %v763 = vld [vmem:[#allocation8 + $0x21] sm:$0x1]
    %v764 = vlaneseq
    %v765 = vshrl.u32 %v764, 7
    %v766 = vsub.s32 0, %v765
    %v767 = vrot.slane %v763, %v766
    %v768 = vmul.f32 %v705, %v767
    %v769 = vmul.f32 %v626, %v767
    %v770 = vmul.f32 %v712, %v767
    %v771 = vadd.f32 %v749, %v768
    %v772 = vadd.f32 %v750, %v769
    %v773 = vadd.f32 %v751, %v770
    %v774 = vld [vmem:[#allocation8 + $0x22] sm:$0x1]
    %v775 = vlaneseq
    %v776 = vshrl.u32 %v775, 7
    %v777 = vsub.s32 0, %v776
    %v778 = vrot.slane %v774, %v777
    %v779 = vmul.f32 %v706, %v778
    %v780 = vmul.f32 %v627, %v778
    %v781 = vmul.f32 %v713, %v778
    %v782 = vadd.f32 %v760, %v779
    %v783 = vadd.f32 %v761, %v780
    %v784 = vadd.f32 %v762, %v781
    %v785 = vadd.f32 %v782, %v771
    %v786 = vadd.f32 %v783, %v772
    %v787 = vadd.f32 %v784, %v773
    %vm791 = vcmask 1043456
    %v792 = vrot.slane %v785, 4
    %v793 = vrot.slane %v786, 4
    %v794 = vsel %vm791, %v792, %v793
    %v795 = vrot.slane %v787, 4
    %v796 = vsel %vm791, %v793, %v795
    %v800 = vadd.f32 %v618, %v792
    %v801 = vadd.f32 %v619, %v794
    %v802 = vadd.f32 %v620, %v796
    %v803 = vld [vmem:[#allocation2 + $0x38] sm:$0xfc]
    %v804 = vld [vmem:[#allocation2 + $0x40] sm:$0xfc]
    %v805 = vld [vmem:[#allocation2 + $0x48] sm:$0xfc]
    %v806 = vld [vmem:[#allocation2 + $0x50] sm:$0xfc]
    %v807 = vld [vmem:[#allocation2 + $0x58] sm:$0xfc]
    %v808 = vld [vmem:[#allocation2 + $0x60] sm:$0xfc]
    %v809 = vld [vmem:[#allocation2 + $0x68] sm:$0xfc]
    %v810 = vld [vmem:[#allocation2 + $0xa8] sm:$0x3]
    %v811 = vld [vmem:[#allocation2 + $0xb0] sm:$0x3]
    %v812 = vld [vmem:[#allocation2 + $0xb8] sm:$0x3]
    %v813 = vld [vmem:[#allocation2 + $0xc0] sm:$0x3]
    %v814 = vld [vmem:[#allocation2 + $0xc8] sm:$0x3]
    %v815 = vld [vmem:[#allocation2 + $0xd0] sm:$0x3]
    %v816 = vld [vmem:[#allocation2 + $0xd8] sm:$0x3]
    %v817 = vld [vmem:[#allocation8 + $0x23] sm:$0x1]
    %v818 = vlaneseq
    %v819 = vshrl.u32 %v818, 7
    %v820 = vsub.s32 0, %v819
    %v821 = vrot.slane %v817, %v820
    %v822 = vmul.f32 %v803, %v821
    %v823 = vmul.f32 %v621, %v821
    %v824 = vmul.f32 %v810, %v821
    %v825 = vld [vmem:[#allocation8 + $0x24] sm:$0x1]
    %v826 = vlaneseq
    %v827 = vshrl.u32 %v826, 7
    %v828 = vsub.s32 0, %v827
    %v829 = vrot.slane %v825, %v828
    %v830 = vmul.f32 %v804, %v829
    %v831 = vmul.f32 %v622, %v829
    %v832 = vmul.f32 %v811, %v829
    %v833 = vld [vmem:[#allocation8 + $0x25] sm:$0x1]
    %v834 = vlaneseq
    %v835 = vshrl.u32 %v834, 7
    %v836 = vsub.s32 0, %v835
    %v837 = vrot.slane %v833, %v836
    %v838 = vmul.f32 %v805, %v837
    %v839 = vmul.f32 %v623, %v837
    %v840 = vmul.f32 %v812, %v837
    %v841 = vadd.f32 %v822, %v838
    %v842 = vadd.f32 %v823, %v839
    %v843 = vadd.f32 %v824, %v840
    %v844 = vld [vmem:[#allocation8 + $0x26] sm:$0x1]
    %v845 = vlaneseq
    %v846 = vshrl.u32 %v845, 7
    %v847 = vsub.s32 0, %v846
    %v848 = vrot.slane %v844, %v847
    %v849 = vmul.f32 %v806, %v848
    %v850 = vmul.f32 %v624, %v848
    %v851 = vmul.f32 %v813, %v848
    %v852 = vadd.f32 %v830, %v849
    %v853 = vadd.f32 %v831, %v850
    %v854 = vadd.f32 %v832, %v851
    %v855 = vld [vmem:[#allocation8 + $0x27] sm:$0x1]
    %v856 = vlaneseq
    %v857 = vshrl.u32 %v856, 7
    %v858 = vsub.s32 0, %v857
    %v859 = vrot.slane %v855, %v858
    %v860 = vmul.f32 %v807, %v859
    %v861 = vmul.f32 %v625, %v859
    %v862 = vmul.f32 %v814, %v859
    %v863 = vadd.f32 %v841, %v860
    %v864 = vadd.f32 %v842, %v861
    %v865 = vadd.f32 %v843, %v862
    %v866 = vld [vmem:[#allocation8 + $0x28] sm:$0x1]
    %v867 = vlaneseq
    %v868 = vshrl.u32 %v867, 7
    %v869 = vsub.s32 0, %v868
    %v870 = vrot.slane %v866, %v869
    %v871 = vmul.f32 %v808, %v870
    %v872 = vmul.f32 %v626, %v870
    %v873 = vmul.f32 %v815, %v870
    %v874 = vadd.f32 %v852, %v871
    %v875 = vadd.f32 %v853, %v872
    %v876 = vadd.f32 %v854, %v873
    %v877 = vld [vmem:[#allocation8 + $0x29] sm:$0x1]
    %v878 = vlaneseq
    %v879 = vshrl.u32 %v878, 7
    %v880 = vsub.s32 0, %v879
    %v881 = vrot.slane %v877, %v880
    %v882 = vmul.f32 %v809, %v881
    %v883 = vmul.f32 %v627, %v881
    %v884 = vmul.f32 %v816, %v881
    %v885 = vadd.f32 %v863, %v882
    %v886 = vadd.f32 %v864, %v883
    %v887 = vadd.f32 %v865, %v884
    %v888 = vadd.f32 %v885, %v874
    %v889 = vadd.f32 %v886, %v875
    %v890 = vadd.f32 %v887, %v876
    %v894 = vrot.slane %v888, 4
    %v895 = vrot.slane %v889, 4
    %v896 = vsel %vm791, %v894, %v895
    %v897 = vrot.slane %v890, 4
    %v898 = vsel %vm791, %v895, %v897
    %v902 = vadd.f32 %v697, %v894
    %v903 = vadd.f32 %v698, %v896
    %v904 = vadd.f32 %v699, %v898
    %v905 = vld [vmem:[#allocation2 + $0x38] sm:$0xf8]
    %v906 = vld [vmem:[#allocation2 + $0x40] sm:$0xf8]
    %v907 = vld [vmem:[#allocation2 + $0x48] sm:$0xf8]
    %v908 = vld [vmem:[#allocation2 + $0x50] sm:$0xf8]
    %v909 = vld [vmem:[#allocation2 + $0x58] sm:$0xf8]
    %v910 = vld [vmem:[#allocation2 + $0x60] sm:$0xf8]
    %v911 = vld [vmem:[#allocation2 + $0x68] sm:$0xf8]
    %v912 = vld [vmem:[#allocation2 + $0xa8] sm:$0x7]
    %v913 = vld [vmem:[#allocation2 + $0xb0] sm:$0x7]
    %v914 = vld [vmem:[#allocation2 + $0xb8] sm:$0x7]
    %v915 = vld [vmem:[#allocation2 + $0xc0] sm:$0x7]
    %v916 = vld [vmem:[#allocation2 + $0xc8] sm:$0x7]
    %v917 = vld [vmem:[#allocation2 + $0xd0] sm:$0x7]
    %v918 = vld [vmem:[#allocation2 + $0xd8] sm:$0x7]
    %v919 = vld [vmem:[#allocation8 + $0x2a] sm:$0x1]
    %v920 = vlaneseq
    %v921 = vshrl.u32 %v920, 7
    %v922 = vsub.s32 0, %v921
    %v923 = vrot.slane %v919, %v922
    %v924 = vmul.f32 %v905, %v923
    %v925 = vmul.f32 %v621, %v923
    %v926 = vmul.f32 %v912, %v923
    %v927 = vld [vmem:[#allocation8 + $0x2b] sm:$0x1]
    %v928 = vlaneseq
    %v929 = vshrl.u32 %v928, 7
    %v930 = vsub.s32 0, %v929
    %v931 = vrot.slane %v927, %v930
    %v932 = vmul.f32 %v906, %v931
    %v933 = vmul.f32 %v622, %v931
    %v934 = vmul.f32 %v913, %v931
    %v935 = vld [vmem:[#allocation8 + $0x2c] sm:$0x1]
    %v936 = vlaneseq
    %v937 = vshrl.u32 %v936, 7
    %v938 = vsub.s32 0, %v937
    %v939 = vrot.slane %v935, %v938
    %v940 = vmul.f32 %v907, %v939
    %v941 = vmul.f32 %v623, %v939
    %v942 = vmul.f32 %v914, %v939
    %v943 = vadd.f32 %v924, %v940
    %v944 = vadd.f32 %v925, %v941
    %v945 = vadd.f32 %v926, %v942
    %v946 = vld [vmem:[#allocation8 + $0x2d] sm:$0x1]
    %v947 = vlaneseq
    %v948 = vshrl.u32 %v947, 7
    %v949 = vsub.s32 0, %v948
    %v950 = vrot.slane %v946, %v949
    %v951 = vmul.f32 %v908, %v950
    %v952 = vmul.f32 %v624, %v950
    %v953 = vmul.f32 %v915, %v950
    %v954 = vadd.f32 %v932, %v951
    %v955 = vadd.f32 %v933, %v952
    %v956 = vadd.f32 %v934, %v953
    %v957 = vld [vmem:[#allocation8 + $0x2e] sm:$0x1]
    %v958 = vlaneseq
    %v959 = vshrl.u32 %v958, 7
    %v960 = vsub.s32 0, %v959
    %v961 = vrot.slane %v957, %v960
    %v962 = vmul.f32 %v909, %v961
    %v963 = vmul.f32 %v625, %v961
    %v964 = vmul.f32 %v916, %v961
    %v965 = vadd.f32 %v943, %v962
    %v966 = vadd.f32 %v944, %v963
    %v967 = vadd.f32 %v945, %v964
    %v968 = vld [vmem:[#allocation8 + $0x2f] sm:$0x1]
    %v969 = vlaneseq
    %v970 = vshrl.u32 %v969, 7
    %v971 = vsub.s32 0, %v970
    %v972 = vrot.slane %v968, %v971
    %v973 = vmul.f32 %v910, %v972
    %v974 = vmul.f32 %v626, %v972
    %v975 = vmul.f32 %v917, %v972
    %v976 = vadd.f32 %v954, %v973
    %v977 = vadd.f32 %v955, %v974
    %v978 = vadd.f32 %v956, %v975
    %v979 = vld [vmem:[#allocation8 + $0x30] sm:$0x1]
    %v980 = vlaneseq
    %v981 = vshrl.u32 %v980, 7
    %v982 = vsub.s32 0, %v981
    %v983 = vrot.slane %v979, %v982
    %v984 = vmul.f32 %v911, %v983
    %v985 = vmul.f32 %v627, %v983
    %v986 = vmul.f32 %v918, %v983
    %v987 = vadd.f32 %v965, %v984
    %v988 = vadd.f32 %v966, %v985
    %v989 = vadd.f32 %v967, %v986
    %v990 = vadd.f32 %v987, %v976
    %v991 = vadd.f32 %v988, %v977
    %v992 = vadd.f32 %v989, %v978
    %vm996 = vcmask 1041408
    %v997 = vrot.slane %v990, 6
    %v998 = vrot.slane %v991, 6
    %v999 = vsel %vm996, %v997, %v998
    %v1000 = vrot.slane %v992, 6
    %v1001 = vsel %vm996, %v998, %v1000
    %v1005 = vadd.f32 %v800, %v997
    %v1006 = vadd.f32 %v801, %v999
    %v1007 = vadd.f32 %v802, %v1001
    %vm1011 = vcmask 1046528
    %v1012 = vrot.slane %v902, 1
    %v1013 = vrot.slane %v903, 1
    %v1014 = vsel %vm1011, %v1012, %v1013
    %v1015 = vrot.slane %v904, 1
    %v1016 = vsel %vm1011, %v1013, %v1015
    %v1020 = vadd.f32 %v1005, %v1014
    %v1021 = vadd.f32 %v1006, %v1016
    %v1022 = vadd.f32 %v1007, %v1015
    %v1023 = vld [vmem:[%s306] sm:$0xe0]
    %v1024 = vld [vmem:[%s306 + $0x8] sm:$0xe0]
    %v1025 = vld [vmem:[%s306 + $0x10] sm:$0xe0]
    %v1026 = vld [vmem:[%s306 + $0x18] sm:$0xe0]
    %v1027 = vld [vmem:[%s306 + $0x20] sm:$0xe0]
    %v1028 = vld [vmem:[%s306 + $0x28] sm:$0xe0]
    %v1029 = vld [vmem:[%s306 + $0x30] sm:$0xe0]
    %v1030 = vld [vmem:[%s306 + $0x38] sm:$0xff]
    %v1031 = vld [vmem:[%s306 + $0x40] sm:$0xff]
    %v1032 = vld [vmem:[%s306 + $0x48] sm:$0xff]
    %v1033 = vld [vmem:[%s306 + $0x50] sm:$0xff]
    %v1034 = vld [vmem:[%s306 + $0x58] sm:$0xff]
    %v1035 = vld [vmem:[%s306 + $0x60] sm:$0xff]
    %v1036 = vld [vmem:[%s306 + $0x68] sm:$0xff]
    %v1037 = vld [vmem:[%s306 + $0x70] sm:$0x1f]
    %v1038 = vld [vmem:[%s306 + $0x78] sm:$0x1f]
    %v1039 = vld [vmem:[%s306 + $0x80] sm:$0x1f]
    %v1040 = vld [vmem:[%s306 + $0x88] sm:$0x1f]
    %v1041 = vld [vmem:[%s306 + $0x90] sm:$0x1f]
    %v1042 = vld [vmem:[%s306 + $0x98] sm:$0x1f]
    %v1043 = vld [vmem:[%s306 + $0xa0] sm:$0x1f]
    %v1044 = vmul.f32 %v1023, %v360
    %v1045 = vmul.f32 %v1030, %v360
    %v1046 = vmul.f32 %v1037, %v360
    %v1047 = vmul.f32 %v1024, %v368
    %v1048 = vmul.f32 %v1031, %v368
    %v1049 = vmul.f32 %v1038, %v368
    %v1050 = vmul.f32 %v1025, %v376
    %v1051 = vmul.f32 %v1032, %v376
    %v1052 = vmul.f32 %v1039, %v376
    %v1053 = vadd.f32 %v1044, %v1050
    %v1054 = vadd.f32 %v1045, %v1051
    %v1055 = vadd.f32 %v1046, %v1052
    %v1056 = vmul.f32 %v1026, %v387
    %v1057 = vmul.f32 %v1033, %v387
    %v1058 = vmul.f32 %v1040, %v387
    %v1059 = vadd.f32 %v1047, %v1056
    %v1060 = vadd.f32 %v1048, %v1057
    %v1061 = vadd.f32 %v1049, %v1058
    %v1062 = vmul.f32 %v1027, %v398
    %v1063 = vmul.f32 %v1034, %v398
    %v1064 = vmul.f32 %v1041, %v398
    %v1065 = vadd.f32 %v1053, %v1062
    %v1066 = vadd.f32 %v1054, %v1063
    %v1067 = vadd.f32 %v1055, %v1064
    %v1068 = vmul.f32 %v1028, %v409
    %v1069 = vmul.f32 %v1035, %v409
    %v1070 = vmul.f32 %v1042, %v409
    %v1071 = vadd.f32 %v1059, %v1068
    %v1072 = vadd.f32 %v1060, %v1069
    %v1073 = vadd.f32 %v1061, %v1070
    %v1074 = vmul.f32 %v1029, %v420
    %v1075 = vmul.f32 %v1036, %v420
    %v1076 = vmul.f32 %v1043, %v420
    %v1077 = vadd.f32 %v1065, %v1074
    %v1078 = vadd.f32 %v1066, %v1075
    %v1079 = vadd.f32 %v1067, %v1076
    %v1080 = vadd.f32 %v1077, %v1071
    %v1081 = vadd.f32 %v1078, %v1072
    %v1082 = vadd.f32 %v1079, %v1073
    %v1083 = vld [vmem:[%s306] sm:$0xc0]
    %v1084 = vld [vmem:[%s306 + $0x8] sm:$0xc0]
    %v1085 = vld [vmem:[%s306 + $0x10] sm:$0xc0]
    %v1086 = vld [vmem:[%s306 + $0x18] sm:$0xc0]
    %v1087 = vld [vmem:[%s306 + $0x20] sm:$0xc0]
    %v1088 = vld [vmem:[%s306 + $0x28] sm:$0xc0]
    %v1089 = vld [vmem:[%s306 + $0x30] sm:$0xc0]
    %v1090 = vld [vmem:[%s306 + $0x70] sm:$0x3f]
    %v1091 = vld [vmem:[%s306 + $0x78] sm:$0x3f]
    %v1092 = vld [vmem:[%s306 + $0x80] sm:$0x3f]
    %v1093 = vld [vmem:[%s306 + $0x88] sm:$0x3f]
    %v1094 = vld [vmem:[%s306 + $0x90] sm:$0x3f]
    %v1095 = vld [vmem:[%s306 + $0x98] sm:$0x3f]
    %v1096 = vld [vmem:[%s306 + $0xa0] sm:$0x3f]
    %v1097 = vmul.f32 %v1083, %v448
    %v1098 = vmul.f32 %v1030, %v448
    %v1099 = vmul.f32 %v1090, %v448
    %v1100 = vmul.f32 %v1084, %v456
    %v1101 = vmul.f32 %v1031, %v456
    %v1102 = vmul.f32 %v1091, %v456
    %v1103 = vmul.f32 %v1085, %v464
    %v1104 = vmul.f32 %v1032, %v464
    %v1105 = vmul.f32 %v1092, %v464
    %v1106 = vadd.f32 %v1097, %v1103
    %v1107 = vadd.f32 %v1098, %v1104
    %v1108 = vadd.f32 %v1099, %v1105
    %v1109 = vmul.f32 %v1086, %v475
    %v1110 = vmul.f32 %v1033, %v475
    %v1111 = vmul.f32 %v1093, %v475
    %v1112 = vadd.f32 %v1100, %v1109
    %v1113 = vadd.f32 %v1101, %v1110
    %v1114 = vadd.f32 %v1102, %v1111
    %v1115 = vmul.f32 %v1087, %v486
    %v1116 = vmul.f32 %v1034, %v486
    %v1117 = vmul.f32 %v1094, %v486
    %v1118 = vadd.f32 %v1106, %v1115
    %v1119 = vadd.f32 %v1107, %v1116
    %v1120 = vadd.f32 %v1108, %v1117
    %v1121 = vmul.f32 %v1088, %v497
    %v1122 = vmul.f32 %v1035, %v497
    %v1123 = vmul.f32 %v1095, %v497
    %v1124 = vadd.f32 %v1112, %v1121
    %v1125 = vadd.f32 %v1113, %v1122
    %v1126 = vadd.f32 %v1114, %v1123
    %v1127 = vmul.f32 %v1089, %v508
    %v1128 = vmul.f32 %v1036, %v508
    %v1129 = vmul.f32 %v1096, %v508
    %v1130 = vadd.f32 %v1118, %v1127
    %v1131 = vadd.f32 %v1119, %v1128
    %v1132 = vadd.f32 %v1120, %v1129
    %v1133 = vadd.f32 %v1130, %v1124
    %v1134 = vadd.f32 %v1131, %v1125
    %v1135 = vadd.f32 %v1132, %v1126
    %v1136 = vld [vmem:[%s306] sm:$0x80]
    %v1137 = vld [vmem:[%s306 + $0x8] sm:$0x80]
    %v1138 = vld [vmem:[%s306 + $0x10] sm:$0x80]
    %v1139 = vld [vmem:[%s306 + $0x18] sm:$0x80]
    %v1140 = vld [vmem:[%s306 + $0x20] sm:$0x80]
    %v1141 = vld [vmem:[%s306 + $0x28] sm:$0x80]
    %v1142 = vld [vmem:[%s306 + $0x30] sm:$0x80]
    %v1143 = vld [vmem:[%s306 + $0x70] sm:$0x7f]
    %v1144 = vld [vmem:[%s306 + $0x78] sm:$0x7f]
    %v1145 = vld [vmem:[%s306 + $0x80] sm:$0x7f]
    %v1146 = vld [vmem:[%s306 + $0x88] sm:$0x7f]
    %v1147 = vld [vmem:[%s306 + $0x90] sm:$0x7f]
    %v1148 = vld [vmem:[%s306 + $0x98] sm:$0x7f]
    %v1149 = vld [vmem:[%s306 + $0xa0] sm:$0x7f]
    %v1150 = vmul.f32 %v1136, %v536
    %v1151 = vmul.f32 %v1030, %v536
    %v1152 = vmul.f32 %v1143, %v536
    %v1153 = vmul.f32 %v1137, %v544
    %v1154 = vmul.f32 %v1031, %v544
    %v1155 = vmul.f32 %v1144, %v544
    %v1156 = vmul.f32 %v1138, %v552
    %v1157 = vmul.f32 %v1032, %v552
    %v1158 = vmul.f32 %v1145, %v552
    %v1159 = vadd.f32 %v1150, %v1156
    %v1160 = vadd.f32 %v1151, %v1157
    %v1161 = vadd.f32 %v1152, %v1158
    %v1162 = vmul.f32 %v1139, %v563
    %v1163 = vmul.f32 %v1033, %v563
    %v1164 = vmul.f32 %v1146, %v563
    %v1165 = vadd.f32 %v1153, %v1162
    %v1166 = vadd.f32 %v1154, %v1163
    %v1167 = vadd.f32 %v1155, %v1164
    %v1168 = vmul.f32 %v1140, %v574
    %v1169 = vmul.f32 %v1034, %v574
    %v1170 = vmul.f32 %v1147, %v574
    %v1171 = vadd.f32 %v1159, %v1168
    %v1172 = vadd.f32 %v1160, %v1169
    %v1173 = vadd.f32 %v1161, %v1170
    %v1174 = vmul.f32 %v1141, %v585
    %v1175 = vmul.f32 %v1035, %v585
    %v1176 = vmul.f32 %v1148, %v585
    %v1177 = vadd.f32 %v1165, %v1174
    %v1178 = vadd.f32 %v1166, %v1175
    %v1179 = vadd.f32 %v1167, %v1176
    %v1180 = vmul.f32 %v1142, %v596
    %v1181 = vmul.f32 %v1036, %v596
    %v1182 = vmul.f32 %v1149, %v596
    %v1183 = vadd.f32 %v1171, %v1180
    %v1184 = vadd.f32 %v1172, %v1181
    %v1185 = vadd.f32 %v1173, %v1182
    %v1186 = vadd.f32 %v1183, %v1177
    %v1187 = vadd.f32 %v1184, %v1178
    %v1188 = vadd.f32 %v1185, %v1179
    %v1192 = vrot.slane %v1186, 2
    %v1193 = vrot.slane %v1187, 2
    %v1194 = vsel %vm609, %v1192, %v1193
    %v1195 = vrot.slane %v1188, 2
    %v1196 = vsel %vm609, %v1193, %v1195
    %v1200 = vadd.f32 %v1080, %v1194
    %v1201 = vadd.f32 %v1081, %v1196
    %v1202 = vadd.f32 %v1082, %v1195
    %v1203 = vld [vmem:[%s306 + $0x70] sm:$0xff]
    %v1204 = vld [vmem:[%s306 + $0x78] sm:$0xff]
    %v1205 = vld [vmem:[%s306 + $0x80] sm:$0xff]
    %v1206 = vld [vmem:[%s306 + $0x88] sm:$0xff]
    %v1207 = vld [vmem:[%s306 + $0x90] sm:$0xff]
    %v1208 = vld [vmem:[%s306 + $0x98] sm:$0xff]
    %v1209 = vld [vmem:[%s306 + $0xa0] sm:$0xff]
    %v1210 = vmul.f32 %v1030, %v632
    %v1211 = vmul.f32 %v1203, %v632
    %v1212 = vmul.f32 %v1031, %v639
    %v1213 = vmul.f32 %v1204, %v639
    %v1214 = vmul.f32 %v1032, %v646
    %v1215 = vmul.f32 %v1205, %v646
    %v1216 = vadd.f32 %v1210, %v1214
    %v1217 = vadd.f32 %v1211, %v1215
    %v1218 = vmul.f32 %v1033, %v655
    %v1219 = vmul.f32 %v1206, %v655
    %v1220 = vadd.f32 %v1212, %v1218
    %v1221 = vadd.f32 %v1213, %v1219
    %v1222 = vmul.f32 %v1034, %v664
    %v1223 = vmul.f32 %v1207, %v664
    %v1224 = vadd.f32 %v1216, %v1222
    %v1225 = vadd.f32 %v1217, %v1223
    %v1226 = vmul.f32 %v1035, %v673
    %v1227 = vmul.f32 %v1208, %v673
    %v1228 = vadd.f32 %v1220, %v1226
    %v1229 = vadd.f32 %v1221, %v1227
    %v1230 = vmul.f32 %v1036, %v682
    %v1231 = vmul.f32 %v1209, %v682
    %v1232 = vadd.f32 %v1224, %v1230
    %v1233 = vadd.f32 %v1225, %v1231
    %v1234 = vadd.f32 %v1232, %v1228
    %v1235 = vadd.f32 %v1233, %v1229
    %v1238 = vrot.slane %v1234, 2
    %v1239 = vrot.slane %v1235, 2
    %v1240 = vsel %vm609, %v1238, %v1239
    %v1244 = vadd.f32 %v1133, %v1238
    %v1245 = vadd.f32 %v1134, %v1240
    %v1246 = vadd.f32 %v1135, %v1239
    %v1247 = vld [vmem:[%s306 + $0x38] sm:$0xfe]
    %v1248 = vld [vmem:[%s306 + $0x40] sm:$0xfe]
    %v1249 = vld [vmem:[%s306 + $0x48] sm:$0xfe]
    %v1250 = vld [vmem:[%s306 + $0x50] sm:$0xfe]
    %v1251 = vld [vmem:[%s306 + $0x58] sm:$0xfe]
    %v1252 = vld [vmem:[%s306 + $0x60] sm:$0xfe]
    %v1253 = vld [vmem:[%s306 + $0x68] sm:$0xfe]
    %v1254 = vld [vmem:[%s306 + $0xa8] sm:$0x1]
    %v1255 = vld [vmem:[%s306 + $0xb0] sm:$0x1]
    %v1256 = vld [vmem:[%s306 + $0xb8] sm:$0x1]
    %v1257 = vld [vmem:[%s306 + $0xc0] sm:$0x1]
    %v1258 = vld [vmem:[%s306 + $0xc8] sm:$0x1]
    %v1259 = vld [vmem:[%s306 + $0xd0] sm:$0x1]
    %v1260 = vld [vmem:[%s306 + $0xd8] sm:$0x1]
    %v1261 = vmul.f32 %v1247, %v718
    %v1262 = vmul.f32 %v1203, %v718
    %v1263 = vmul.f32 %v1254, %v718
    %v1264 = vmul.f32 %v1248, %v726
    %v1265 = vmul.f32 %v1204, %v726
    %v1266 = vmul.f32 %v1255, %v726
    %v1267 = vmul.f32 %v1249, %v734
    %v1268 = vmul.f32 %v1205, %v734
    %v1269 = vmul.f32 %v1256, %v734
    %v1270 = vadd.f32 %v1261, %v1267
    %v1271 = vadd.f32 %v1262, %v1268
    %v1272 = vadd.f32 %v1263, %v1269
    %v1273 = vmul.f32 %v1250, %v745
    %v1274 = vmul.f32 %v1206, %v745
    %v1275 = vmul.f32 %v1257, %v745
    %v1276 = vadd.f32 %v1264, %v1273
    %v1277 = vadd.f32 %v1265, %v1274
    %v1278 = vadd.f32 %v1266, %v1275
    %v1279 = vmul.f32 %v1251, %v756
    %v1280 = vmul.f32 %v1207, %v756
    %v1281 = vmul.f32 %v1258, %v756
    %v1282 = vadd.f32 %v1270, %v1279
    %v1283 = vadd.f32 %v1271, %v1280
    %v1284 = vadd.f32 %v1272, %v1281
    %v1285 = vmul.f32 %v1252, %v767
    %v1286 = vmul.f32 %v1208, %v767
    %v1287 = vmul.f32 %v1259, %v767
    %v1288 = vadd.f32 %v1276, %v1285
    %v1289 = vadd.f32 %v1277, %v1286
    %v1290 = vadd.f32 %v1278, %v1287
    %v1291 = vmul.f32 %v1253, %v778
    %v1292 = vmul.f32 %v1209, %v778
    %v1293 = vmul.f32 %v1260, %v778
    %v1294 = vadd.f32 %v1282, %v1291
    %v1295 = vadd.f32 %v1283, %v1292
    %v1296 = vadd.f32 %v1284, %v1293
    %v1297 = vadd.f32 %v1294, %v1288
    %v1298 = vadd.f32 %v1295, %v1289
    %v1299 = vadd.f32 %v1296, %v1290
    %v1303 = vrot.slane %v1297, 4
    %v1304 = vrot.slane %v1298, 4
    %v1305 = vsel %vm791, %v1303, %v1304
    %v1306 = vrot.slane %v1299, 4
    %v1307 = vsel %vm791, %v1304, %v1306
    %v1311 = vadd.f32 %v1200, %v1303
    %v1312 = vadd.f32 %v1201, %v1305
    %v1313 = vadd.f32 %v1202, %v1307
    %v1314 = vld [vmem:[%s306 + $0x38] sm:$0xfc]
    %v1315 = vld [vmem:[%s306 + $0x40] sm:$0xfc]
    %v1316 = vld [vmem:[%s306 + $0x48] sm:$0xfc]
    %v1317 = vld [vmem:[%s306 + $0x50] sm:$0xfc]
    %v1318 = vld [vmem:[%s306 + $0x58] sm:$0xfc]
    %v1319 = vld [vmem:[%s306 + $0x60] sm:$0xfc]
    %v1320 = vld [vmem:[%s306 + $0x68] sm:$0xfc]
    %v1321 = vld [vmem:[%s306 + $0xa8] sm:$0x3]
    %v1322 = vld [vmem:[%s306 + $0xb0] sm:$0x3]
    %v1323 = vld [vmem:[%s306 + $0xb8] sm:$0x3]
    %v1324 = vld [vmem:[%s306 + $0xc0] sm:$0x3]
    %v1325 = vld [vmem:[%s306 + $0xc8] sm:$0x3]
    %v1326 = vld [vmem:[%s306 + $0xd0] sm:$0x3]
    %v1327 = vld [vmem:[%s306 + $0xd8] sm:$0x3]
    %v1328 = vmul.f32 %v1314, %v821
    %v1329 = vmul.f32 %v1203, %v821
    %v1330 = vmul.f32 %v1321, %v821
    %v1331 = vmul.f32 %v1315, %v829
    %v1332 = vmul.f32 %v1204, %v829
    %v1333 = vmul.f32 %v1322, %v829
    %v1334 = vmul.f32 %v1316, %v837
    %v1335 = vmul.f32 %v1205, %v837
    %v1336 = vmul.f32 %v1323, %v837
    %v1337 = vadd.f32 %v1328, %v1334
    %v1338 = vadd.f32 %v1329, %v1335
    %v1339 = vadd.f32 %v1330, %v1336
    %v1340 = vmul.f32 %v1317, %v848
    %v1341 = vmul.f32 %v1206, %v848
    %v1342 = vmul.f32 %v1324, %v848
    %v1343 = vadd.f32 %v1331, %v1340
    %v1344 = vadd.f32 %v1332, %v1341
    %v1345 = vadd.f32 %v1333, %v1342
    %v1346 = vmul.f32 %v1318, %v859
    %v1347 = vmul.f32 %v1207, %v859
    %v1348 = vmul.f32 %v1325, %v859
    %v1349 = vadd.f32 %v1337, %v1346
    %v1350 = vadd.f32 %v1338, %v1347
    %v1351 = vadd.f32 %v1339, %v1348
    %v1352 = vmul.f32 %v1319, %v870
    %v1353 = vmul.f32 %v1208, %v870
    %v1354 = vmul.f32 %v1326, %v870
    %v1355 = vadd.f32 %v1343, %v1352
    %v1356 = vadd.f32 %v1344, %v1353
    %v1357 = vadd.f32 %v1345, %v1354
    %v1358 = vmul.f32 %v1320, %v881
    %v1359 = vmul.f32 %v1209, %v881
    %v1360 = vmul.f32 %v1327, %v881
    %v1361 = vadd.f32 %v1349, %v1358
    %v1362 = vadd.f32 %v1350, %v1359
    %v1363 = vadd.f32 %v1351, %v1360
    %v1364 = vadd.f32 %v1361, %v1355
    %v1365 = vadd.f32 %v1362, %v1356
    %v1366 = vadd.f32 %v1363, %v1357
    %v1370 = vrot.slane %v1364, 4
    %v1371 = vrot.slane %v1365, 4
    %v1372 = vsel %vm791, %v1370, %v1371
    %v1373 = vrot.slane %v1366, 4
    %v1374 = vsel %vm791, %v1371, %v1373
    %v1378 = vadd.f32 %v1244, %v1370
    %v1379 = vadd.f32 %v1245, %v1372
    %v1380 = vadd.f32 %v1246, %v1374
    %v1381 = vld [vmem:[%s306 + $0x38] sm:$0xf8]
    %v1382 = vld [vmem:[%s306 + $0x40] sm:$0xf8]
    %v1383 = vld [vmem:[%s306 + $0x48] sm:$0xf8]
    %v1384 = vld [vmem:[%s306 + $0x50] sm:$0xf8]
    %v1385 = vld [vmem:[%s306 + $0x58] sm:$0xf8]
    %v1386 = vld [vmem:[%s306 + $0x60] sm:$0xf8]
    %v1387 = vld [vmem:[%s306 + $0x68] sm:$0xf8]
    %v1388 = vld [vmem:[%s306 + $0xa8] sm:$0x7]
    %v1389 = vld [vmem:[%s306 + $0xb0] sm:$0x7]
    %v1390 = vld [vmem:[%s306 + $0xb8] sm:$0x7]
    %v1391 = vld [vmem:[%s306 + $0xc0] sm:$0x7]
    %v1392 = vld [vmem:[%s306 + $0xc8] sm:$0x7]
    %v1393 = vld [vmem:[%s306 + $0xd0] sm:$0x7]
    %v1394 = vld [vmem:[%s306 + $0xd8] sm:$0x7]
    %v1395 = vmul.f32 %v1381, %v923
    %v1396 = vmul.f32 %v1203, %v923
    %v1397 = vmul.f32 %v1388, %v923
    %v1398 = vmul.f32 %v1382, %v931
    %v1399 = vmul.f32 %v1204, %v931
    %v1400 = vmul.f32 %v1389, %v931
    %v1401 = vmul.f32 %v1383, %v939
    %v1402 = vmul.f32 %v1205, %v939
    %v1403 = vmul.f32 %v1390, %v939
    %v1404 = vadd.f32 %v1395, %v1401
    %v1405 = vadd.f32 %v1396, %v1402
    %v1406 = vadd.f32 %v1397, %v1403
    %v1407 = vmul.f32 %v1384, %v950
    %v1408 = vmul.f32 %v1206, %v950
    %v1409 = vmul.f32 %v1391, %v950
    %v1410 = vadd.f32 %v1398, %v1407
    %v1411 = vadd.f32 %v1399, %v1408
    %v1412 = vadd.f32 %v1400, %v1409
    %v1413 = vmul.f32 %v1385, %v961
    %v1414 = vmul.f32 %v1207, %v961
    %v1415 = vmul.f32 %v1392, %v961
    %v1416 = vadd.f32 %v1404, %v1413
    %v1417 = vadd.f32 %v1405, %v1414
    %v1418 = vadd.f32 %v1406, %v1415
    %v1419 = vmul.f32 %v1386, %v972
    %v1420 = vmul.f32 %v1208, %v972
    %v1421 = vmul.f32 %v1393, %v972
    %v1422 = vadd.f32 %v1410, %v1419
    %v1423 = vadd.f32 %v1411, %v1420
    %v1424 = vadd.f32 %v1412, %v1421
    %v1425 = vmul.f32 %v1387, %v983
    %v1426 = vmul.f32 %v1209, %v983
    %v1427 = vmul.f32 %v1394, %v983
    %v1428 = vadd.f32 %v1416, %v1425
    %v1429 = vadd.f32 %v1417, %v1426
    %v1430 = vadd.f32 %v1418, %v1427
    %v1431 = vadd.f32 %v1428, %v1422
    %v1432 = vadd.f32 %v1429, %v1423
    %v1433 = vadd.f32 %v1430, %v1424
    %v1437 = vrot.slane %v1431, 6
    %v1438 = vrot.slane %v1432, 6
    %v1439 = vsel %vm996, %v1437, %v1438
    %v1440 = vrot.slane %v1433, 6
    %v1441 = vsel %vm996, %v1438, %v1440
    %v1445 = vadd.f32 %v1311, %v1437
    %v1446 = vadd.f32 %v1312, %v1439
    %v1447 = vadd.f32 %v1313, %v1441
    %v1451 = vrot.slane %v1378, 1
    %v1452 = vrot.slane %v1379, 1
    %v1453 = vsel %vm1011, %v1451, %v1452
    %v1454 = vrot.slane %v1380, 1
    %v1455 = vsel %vm1011, %v1452, %v1454
    %v1459 = vadd.f32 %v1445, %v1453
    %v1460 = vadd.f32 %v1446, %v1455
    %v1461 = vadd.f32 %v1447, %v1454
    %vm1465 = vcmask 1042432
    %v1466 = vrot.slane %v1020, 5
    %v1467 = vrot.slane %v1021, 5
    %v1468 = vsel %vm1465, %v1466, %v1467
    %v1469 = vrot.slane %v1022, 5
    %v1470 = vsel %vm1465, %v1467, %v1469
    %v1476 = vrot.slane %v1459, 5
    %v1477 = vrot.slane %v1460, 5
    %v1478 = vsel %vm1465, %v1476, %v1477
    %v1479 = vrot.slane %v1461, 5
    %v1480 = vsel %vm1465, %v1477, %v1479
    %v1483 = vld [vmem:[%s4] sm:$0x1]
    %v1485 = vlaneseq
    %v1486 = vshrl.u32 %v1485, 7
    %v1487 = vsub.s32 0, %v1486
    %v1488 = vrot.slane %v1483, %v1487
    %v1490 = vadd.f32 %v1468, %v1488
    %v1491 = vadd.f32 %v1470, %v1488
    %v1492 = vadd.f32 %v1478, %v1488
    %v1493 = vadd.f32 %v1480, %v1488
    %v1494 = vmax.f32 %v1490, 0.0
    %v1495 = vmax.f32 %v1491, 0.0
    %v1496 = vmax.f32 %v1492, 0.0
    %v1497 = vmax.f32 %v1493, 0.0
    %v1498 = vld [vmem:[#allocation9] sm:$0xff]
    %v1499 = vld [vmem:[#allocation9 + $0x8] sm:$0xff]
    %v1500 = vld [vmem:[#allocation9 + $0x10] sm:$0xff]
    %v1501 = vld [vmem:[#allocation9 + $0x18] sm:$0xff]
    %v1502 = vld [vmem:[#allocation9 + $0x20] sm:$0xff]
    %v1503 = vld [vmem:[#allocation9 + $0x28] sm:$0xff]
    %v1504 = vld [vmem:[#allocation9 + $0x30] sm:$0xff]
    %v1505 = vld [vmem:[#allocation9 + $0x38] sm:$0xff]
    %v1506 = vld [vmem:[#allocation9 + $0x40] sm:$0xff]
    %v1507 = vld [vmem:[#allocation9 + $0x48] sm:$0xff]
    %v1508 = vld [vmem:[#allocation9 + $0x50] sm:$0xff]
    %v1509 = vld [vmem:[#allocation9 + $0x58] sm:$0xff]
    %v1510 = vld [vmem:[#allocation9 + $0x60] sm:$0xff]
    %v1511 = vld [vmem:[#allocation9 + $0x68] sm:$0xff]
    %v1512 = vld [vmem:[#allocation9 + $0x70] sm:$0xff]
    %v1513 = vld [vmem:[#allocation9 + $0x78] sm:$0xff]
    %v1514 = vld [vmem:[%s6] sm:$0x1]
    %v1516 = vlaneseq
    %v1517 = vshrl.u32 %v1516, 7
    %v1518 = vsub.s32 0, %v1517
    %v1519 = vrot.slane %v1514, %v1518
    %1521 = vmatprep.subr.mxu0 0.0
    %1522 = vmatpush1.msra.mxu0 %v1498
    %1523 = vmatprep.subr.mxu0 0.0
    %1524 = vmatpush1.msra.mxu0 %v1499
    %1525 = vmatprep.subr.mxu0 0.0
    %1526 = vmatpush1.msra.mxu0 %v1500
    %1527 = vmatprep.subr.mxu0 0.0
    %1528 = vmatpush1.msra.mxu0 %v1501
    %1529 = vmatprep.subr.mxu0 0.0
    %1530 = vmatpush1.msra.mxu0 %v1502
    %1531 = vmatprep.subr.mxu0 0.0
    %1532 = vmatpush1.msra.mxu0 %v1503
    %1533 = vmatprep.subr.mxu0 0.0
    %1534 = vmatpush1.msra.mxu0 %v1504
    %1535 = vmatprep.subr.mxu0 0.0
    %1536 = vmatpush1.msra.mxu0 %v1505
    %1537 = vmatprep.subr.mxu0 0.0
    %1538 = vmatpush1.msra.mxu0 %v1506
    %1539 = vmatprep.subr.mxu0 0.0
    %1540 = vmatpush1.msra.mxu0 %v1507
    %1541 = vmatprep.subr.mxu0 0.0
    %1542 = vmatpush1.msra.mxu0 %v1508
    %1543 = vmatprep.subr.mxu0 0.0
    %1544 = vmatpush1.msra.mxu0 %v1509
    %1545 = vmatprep.subr.mxu0 0.0
    %1546 = vmatpush1.msra.mxu0 %v1510
    %1547 = vmatprep.subr.mxu0 0.0
    %1548 = vmatpush1.msra.mxu0 %v1511
    %1549 = vmatprep.subr.mxu0 0.0
    %1550 = vmatpush1.msra.mxu0 %v1512
    %1551 = vmatprep.subr.mxu0 0.0
    %1552 = vmatpush1.msra.mxu0 %v1513
    %1553 = vmatprep.subr.mxu0 0.0
    %1554 = vmatpush1.msra.mxu0 0.0
    %1555 = vmatprep.subr.mxu0 0.0
    %1556 = vmatpush1.msra.mxu0 0.0
    %1557 = vmatprep.subr.mxu0 0.0
    %1558 = vmatpush1.msra.mxu0 0.0
    %1559 = vmatprep.subr.mxu0 0.0
    %1560 = vmatpush1.msra.mxu0 0.0
    %1561 = vmatprep.subr.mxu0 0.0
    %1562 = vmatpush1.msra.mxu0 0.0
    %1563 = vmatprep.subr.mxu0 0.0
    %1564 = vmatpush1.msra.mxu0 0.0
    %1565 = vmatprep.subr.mxu0 0.0
    %1566 = vmatpush1.msra.mxu0 0.0
    %1567 = vmatprep.subr.mxu0 0.0
    %1568 = vmatpush1.msra.mxu0 0.0
    %1569 = vmatprep.subr.mxu0 0.0
    %1570 = vmatpush1.msra.mxu0 0.0
    %1571 = vmatprep.subr.mxu0 0.0
    %1572 = vmatpush1.msra.mxu0 0.0
    %1573 = vmatprep.subr.mxu0 0.0
    %1574 = vmatpush1.msra.mxu0 0.0
    %1575 = vmatprep.subr.mxu0 0.0
    %1576 = vmatpush1.msra.mxu0 0.0
    %1577 = vmatprep.subr.mxu0 0.0
    %1578 = vmatpush1.msra.mxu0 0.0
    %1579 = vmatprep.subr.mxu0 0.0
    %1580 = vmatpush1.msra.mxu0 0.0
    %1581 = vmatprep.subr.mxu0 0.0
    %1582 = vmatpush1.msra.mxu0 0.0
    %1583 = vmatprep.subr.mxu0 0.0
    %1584 = vmatpush1.msra.mxu0 0.0
    %1585 = vmatprep.mubr.f32.mxu0 0.0
    %1586 = vmatmul.mubr.f32.gmra.mrb[0].mxu0 %v1494
    %v1587 = vpop.f32.mrb[0].mxu0
    %v1588 = vadd.f32 %v1519, %v1587
    %v1589 = vpop.f32.mrb[0].mxu0
    %1590 = vmatprep.mubr.f32.mxu0 0.0
    %1591 = vmatmul.mubr.f32.gmra.mrb[0].mxu0 %v1495
    %v1592 = vpop.f32.mrb[0].mxu0
    %v1593 = vadd.f32 %v1519, %v1592
    %v1594 = vpop.f32.mrb[0].mxu0
    %1595 = vmatprep.mubr.f32.mxu0 0.0
    %1596 = vmatmul.mubr.f32.gmra.mrb[0].mxu0 %v1496
    %v1597 = vpop.f32.mrb[0].mxu0
    %v1598 = vadd.f32 %v1519, %v1597
    %v1599 = vpop.f32.mrb[0].mxu0
    %1600 = vmatprep.mubr.f32.mxu0 0.0
    %1601 = vmatmul.mubr.f32.gmra.mrb[0].mxu0 %v1497
    %v1602 = vpop.f32.mrb[0].mxu0
    %v1603 = vadd.f32 %v1519, %v1602
    %v1604 = vpop.f32.mrb[0].mxu0
    %1605 = vdwg.mxu0
    %v1606 = vld [vmem:[#allocation3] sm:$0xff]
    %v1607 = vld [vmem:[#allocation3 + $0x8] sm:$0xff]
    %v1608 = vld [vmem:[#allocation3 + $0x10] sm:$0xff]
    %v1609 = vld [vmem:[#allocation3 + $0x18] sm:$0xff]
    %v1610 = vadd.f32 %v1606, %v1588
    %v1611 = vadd.f32 %v1607, %v1593
    %v1612 = vadd.f32 %v1608, %v1598
    %v1613 = vadd.f32 %v1609, %v1603
    %1614 = vst [vmem:[#allocation11] sm:$0xff] %v1610
    %1615 = vst [vmem:[#allocation11 + $0x8] sm:$0xff] %v1611
    %1616 = vst [vmem:[#allocation11 + $0x10] sm:$0xff] %v1612
    %1617 = vst [vmem:[#allocation11 + $0x18] sm:$0xff] %v1613
    // Predicated region
    $region46: #{tpu_custom_call.1} parent=1 // pred_check
      _
    $region47: #{tpu_custom_call.1} parent=1 // pred_check_branch
      %1619 = sbr.rel (0) target = $region49
    $region48: #{tpu_custom_call.1} parent=1 // pred_region
      %s1621 = ssub.s32 512, 512
      %1622 = vsyncadd [#allocation5], %s1621
      %s1623 = sshll.u32 [#allocation11], 4
      %s1624 = int_to_ptr.vmem [resolvable:$true] %s1623
      %1629 = dma.vmem_to_hbm [thread:$0]  %s1624, 512, %s7, [#allocation5], 128, 128, 8
    $region49: #{tpu_custom_call.1} parent=1 // pred_fallthru
      _
    // Predicated region
    $region50: #{tpu_custom_call.1} parent=1 // pred_check
      _
    $region51: #{tpu_custom_call.1} parent=1 // pred_check_branch
      %1631 = sbr.rel (0) target = $region53
    $region52: #{tpu_custom_call.1} parent=1 // pred_region
      %1632 = dma.done [#allocation5], 512
    $region53: #{tpu_custom_call.1} parent=1 // pred_fallthru
      _
    %1633 = vsyncpa [#allocation4], 1
    %1634 = vsyncpa [#allocation7], 1
    %1635 = vsyncpa [#allocation10], 1
    %1636 = vsyncpa [#allocation5], 1

</llo_original>
